<compile_context>
chip_gen: v6e
topology: v6e:2x2x1
jax: 0.10.0
libtpu: 0.0.40
codegen_flags: <defaults>
</compile_context>

<pallas_src>
import jax
import jax.numpy as jnp
from jax.experimental import pallas as pl
from jax.experimental.pallas import tpu as pltpu


def _round_up(n, m):
    return ((n + m - 1) // m) * m


def _net_kernel(x_ref, w1_ref, b1_ref, w2_ref, b2_ref, w3_ref, b3_ref, o_ref):
    # x arrives f32 straight from HBM (no wrapper-side cast = no extra HBM
    # pass); cast to bf16 in-register just before the MXU, accumulate in f32.
    x_bf16 = x_ref[...].astype(jnp.bfloat16)
    h1 = jnp.dot(x_bf16, w1_ref[...], preferred_element_type=jnp.float32)
    h1 = jnp.maximum(h1 + b1_ref[...], 0.0)                    # relu(l1), f32

    # Layers 2/3: bf16 x bf16 single-pass MXU dots, f32 accumulation.
    h2 = jnp.dot(h1.astype(jnp.bfloat16), w2_ref[...],
                 preferred_element_type=jnp.float32)
    h2 = jnp.maximum(h2 + b2_ref[...], 0.0)                    # relu(l2), f32

    logits = jnp.dot(h2.astype(jnp.bfloat16), w3_ref[...],
                     preferred_element_type=jnp.float32)
    logits = logits + b3_ref[...]                              # (bm, 10)

    # Exactly mirrors torch: x.exp().sum(axis=1).log() (no max-subtraction).
    o_ref[...] = jnp.log(jnp.sum(jnp.exp(logits), axis=1, keepdims=True))


def net_forward(x, params, *, block_m=512):
    """x: (B, 784) float32 -> (B,) float32."""
    w1, b1, w2, b2, w3, b3 = params
    B, D = x.shape
    n_hidden = w1.shape[1]
    n_out = w3.shape[1]

    # Clamp the tile for tiny batches.
    bm = min(block_m, _round_up(B, 8))
    # v7x megacore: aim for >= 4 grid steps (>= 2 per TensorCore) so each
    # core's BlockSpec pipeline has a next tile to prefetch. Only split when
    # each block stays reasonably sized.
    target_blocks = 4
    if B >= target_blocks * 64:
        bm = min(bm, _round_up(-(-B // target_blocks), 8))

    # Pad B up to a tile multiple (padded rows are computed and sliced off;
    # they never affect real rows). The demo picks B divisible by bm, so this
    # path (an extra pass over x) is normally not taken.
    B_pad = _round_up(B, bm)
    num_blocks = B_pad // bm
    x_in = x
    if B_pad != B:
        x_in = jnp.pad(x_in, ((0, B_pad - B), (0, 0)))

    # Weights are tiny (~50 KB total as bf16); cast once at the boundary and
    # keep them resident in VMEM across all grid steps (constant index maps).
    w1_in = w1.astype(jnp.bfloat16)
    w2_in = w2.astype(jnp.bfloat16)
    w3_in = w3.astype(jnp.bfloat16)

    grid_spec = pl.GridSpec(
        grid=(num_blocks,),
        in_specs=[
            # Streamed f32 activation tile (block_m rows per grid step).
            pl.BlockSpec((bm, D), lambda i: (i, 0)),
            # Weights / biases: full-array blocks, constant index maps ->
            # DMA'd once, resident in VMEM for the whole grid.
            pl.BlockSpec(w1_in.shape, lambda i: (0, 0)),
            pl.BlockSpec(b1.shape, lambda i: (0, 0)),
            pl.BlockSpec(w2_in.shape, lambda i: (0, 0)),
            pl.BlockSpec(b2.shape, lambda i: (0, 0)),
            pl.BlockSpec(w3_in.shape, lambda i: (0, 0)),
            pl.BlockSpec(b3.shape, lambda i: (0, 0)),
        ],
        out_specs=pl.BlockSpec((bm, 1), lambda i: (i, 0)),
    )

    flops = 2 * B_pad * (D * n_hidden + n_hidden * n_hidden + n_hidden * n_out)
    bytes_accessed = (
        B_pad * D * 4                                            # x (f32)
        + (D * n_hidden + n_hidden * n_hidden + n_hidden * n_out) * 2  # bf16 weights
        + (n_hidden + n_hidden + n_out) * 4                      # f32 biases
        + B_pad * 4                                              # output column
    )
    cost = pl.CostEstimate(
        flops=flops,
        transcendentals=(n_out + 1) * B_pad,   # n_out exps + 1 log per row
        bytes_accessed=bytes_accessed,
    )

    out = pl.pallas_call(
        _net_kernel,
        out_shape=jax.ShapeDtypeStruct((B_pad, 1), jnp.float32),
        grid_spec=grid_spec,
        compiler_params=pltpu.CompilerParams(
            # Batch tiles are independent -> shardable across both TCs on v7x.
            dimension_semantics=("parallel",),
            # Headroom for block_m sweeps (1024/2048) under v5e's 16 MiB
            # scoped-VMEM default; well within physical VMEM on every chip.
            vmem_limit_bytes=32 * 1024 * 1024,
        ),
        cost_estimate=cost,
    )(x_in, w1_in, b1, w2_in, b2, w3_in, b3)

    return out[:B, 0]


def init_params(key, n_units=32, n_out=10, in_dim=28 * 28):
    """Kaiming-uniform-ish init matching nn.Linear shapes.
    Weights stored transposed: (in_features, out_features)."""
    ks = jax.random.split(key, 6)

    def linear(kw, kb, fan_in, fan_out):
        bound = 1.0 / jnp.sqrt(fan_in)
        w = jax.random.uniform(kw, (fan_in, fan_out), jnp.float32, -bound, bound)
        b = jax.random.uniform(kb, (1, fan_out), jnp.float32, -bound, bound)
        return w, b

    w1, b1 = linear(ks[0], ks[1], in_dim, n_units)
    w2, b2 = linear(ks[2], ks[3], n_units, n_units)
    w3, b3 = linear(ks[4], ks[5], n_units, n_out)
    return (w1, b1, w2, b2, w3, b3)


def net_forward_ref(x, params):
    w1, b1, w2, b2, w3, b3 = params
    h = jnp.maximum(x @ w1 + b1, 0.0)
    h = jnp.maximum(h @ w2 + b2, 0.0)
    logits = h @ w3 + b3
    # NOTE: mirrors the torch code exactly (exp -> sum -> log, no max
    # subtraction); can overflow for |logits| >~ 88, fine for this init/range.
    return jnp.log(jnp.sum(jnp.exp(logits), axis=1))


if __name__ == "__main__":
    key = jax.random.PRNGKey(0)
    k_x, k_p = jax.random.split(key)

    # B=1024 with the >=4-block clamp -> 4 grid steps of 256 rows:
    # 2 steps per TensorCore on v7x so the x-tile DMA can double-buffer.
    B, n_units, n_out = 1024, 32, 10
    # mimic mnist.data / 255 scaling: inputs in [0, 1], flattened 28*28
    x = jax.random.uniform(k_x, (B, 28 * 28), jnp.float32, 0.0, 1.0)
    params = init_params(k_p, n_units=n_units, n_out=n_out)

    out = jax.block_until_ready(net_forward(x, params, block_m=512))

    ref = net_forward_ref(x, params)
    assert out.shape == (B,)
    # bf16 MXU inputs (f32 accumulation) -> slightly looser tolerance vs f32.
    assert jnp.allclose(out, ref, atol=2e-2, rtol=2e-2), (out, ref)

    print("KERNEL_OK")
</pallas_src>

<mosaic_0001>
module attributes {stable_mosaic.version = 11 : i64} {
  func.func @_net_kernel(%arg0: i32, %arg1: memref<256x784xf32, #tpu.memory_space<vmem>>, %arg2: memref<784x32xbf16, #tpu.memory_space<vmem>>, %arg3: memref<1x32xf32, #tpu.memory_space<vmem>>, %arg4: memref<32x32xbf16, #tpu.memory_space<vmem>>, %arg5: memref<1x32xf32, #tpu.memory_space<vmem>>, %arg6: memref<32x10xbf16, #tpu.memory_space<vmem>>, %arg7: memref<1x10xf32, #tpu.memory_space<vmem>>, %arg8: memref<256x1xf32, #tpu.memory_space<vmem>>) attributes {dimension_semantics = [#tpu.dimension_semantics<parallel>], iteration_bounds = array<i64: 4>, scalar_prefetch = 0 : i64, scratch_operands = 0 : i64, tpu.core_type = #tpu.core_type<tc>, window_params = [{transform_indices = @transform_0, window_bounds = array<i64: 256, 784>}, {pipeline_mode = #tpu.pipeline_mode<synchronous>, transform_indices = @transform_1, window_bounds = array<i64: 784, 32>}, {pipeline_mode = #tpu.pipeline_mode<synchronous>, transform_indices = @transform_2, window_bounds = array<i64: 1, 32>}, {pipeline_mode = #tpu.pipeline_mode<synchronous>, transform_indices = @transform_3, window_bounds = array<i64: 32, 32>}, {pipeline_mode = #tpu.pipeline_mode<synchronous>, transform_indices = @transform_4, window_bounds = array<i64: 1, 32>}, {pipeline_mode = #tpu.pipeline_mode<synchronous>, transform_indices = @transform_5, window_bounds = array<i64: 32, 10>}, {pipeline_mode = #tpu.pipeline_mode<synchronous>, transform_indices = @transform_6, window_bounds = array<i64: 1, 10>}, {transform_indices = @transform_7, window_bounds = array<i64: 256, 1>}]} {
    %c0 = arith.constant 0 : index
    %c0_0 = arith.constant 0 : index
    %0 = vector.load %arg1[%c0, %c0_0] : memref<256x784xf32, #tpu.memory_space<vmem>>, vector<256x784xf32>
    %1 = arith.truncf %0 : vector<256x784xf32> to vector<256x784xbf16>
    %c0_1 = arith.constant 0 : index
    %c0_2 = arith.constant 0 : index
    %2 = vector.load %arg2[%c0_1, %c0_2] : memref<784x32xbf16, #tpu.memory_space<vmem>>, vector<784x32xbf16>
    %cst = arith.constant dense<0.000000e+00> : vector<256x32xf32>
    %3 = tpu.matmul %1, %2, %cst {dimension_numbers = #tpu.dot_dimension_numbers<[1], [0], [0], [1], [0, 0, 1, 1], [], []>} : vector<256x784xbf16>, vector<784x32xbf16>, vector<256x32xf32> -> vector<256x32xf32>
    %c0_3 = arith.constant 0 : index
    %c0_4 = arith.constant 0 : index
    %4 = vector.load %arg3[%c0_3, %c0_4] : memref<1x32xf32, #tpu.memory_space<vmem>>, vector<1x32xf32>
    %5 = vector.broadcast %4 : vector<1x32xf32> to vector<256x32xf32>
    %6 = arith.addf %3, %5 : vector<256x32xf32>
    %cst_5 = arith.constant 0.000000e+00 : f32
    %7 = vector.broadcast %cst_5 : f32 to vector<256x32xf32>
    %8 = arith.maximumf %6, %7 : vector<256x32xf32>
    %9 = arith.truncf %8 : vector<256x32xf32> to vector<256x32xbf16>
    %c0_6 = arith.constant 0 : index
    %c0_7 = arith.constant 0 : index
    %10 = vector.load %arg4[%c0_6, %c0_7] : memref<32x32xbf16, #tpu.memory_space<vmem>>, vector<32x32xbf16>
    %cst_8 = arith.constant dense<0.000000e+00> : vector<256x32xf32>
    %11 = tpu.matmul %9, %10, %cst_8 {dimension_numbers = #tpu.dot_dimension_numbers<[1], [0], [0], [1], [0, 0, 1, 1], [], []>} : vector<256x32xbf16>, vector<32x32xbf16>, vector<256x32xf32> -> vector<256x32xf32>
    %c0_9 = arith.constant 0 : index
    %c0_10 = arith.constant 0 : index
    %12 = vector.load %arg5[%c0_9, %c0_10] : memref<1x32xf32, #tpu.memory_space<vmem>>, vector<1x32xf32>
    %13 = vector.broadcast %12 : vector<1x32xf32> to vector<256x32xf32>
    %14 = arith.addf %11, %13 : vector<256x32xf32>
    %cst_11 = arith.constant 0.000000e+00 : f32
    %15 = vector.broadcast %cst_11 : f32 to vector<256x32xf32>
    %16 = arith.maximumf %14, %15 : vector<256x32xf32>
    %17 = arith.truncf %16 : vector<256x32xf32> to vector<256x32xbf16>
    %c0_12 = arith.constant 0 : index
    %c0_13 = arith.constant 0 : index
    %18 = vector.load %arg6[%c0_12, %c0_13] : memref<32x10xbf16, #tpu.memory_space<vmem>>, vector<32x10xbf16>
    %cst_14 = arith.constant dense<0.000000e+00> : vector<256x10xf32>
    %19 = tpu.matmul %17, %18, %cst_14 {dimension_numbers = #tpu.dot_dimension_numbers<[1], [0], [0], [1], [0, 0, 1, 1], [], []>} : vector<256x32xbf16>, vector<32x10xbf16>, vector<256x10xf32> -> vector<256x10xf32>
    %c0_15 = arith.constant 0 : index
    %c0_16 = arith.constant 0 : index
    %20 = vector.load %arg7[%c0_15, %c0_16] : memref<1x10xf32, #tpu.memory_space<vmem>>, vector<1x10xf32>
    %21 = vector.broadcast %20 : vector<1x10xf32> to vector<256x10xf32>
    %22 = arith.addf %19, %21 : vector<256x10xf32>
    %23 = math.exp %22 : vector<256x10xf32>
    %cst_17 = arith.constant dense<0.000000e+00> : vector<256xf32>
    %24 = vector.multi_reduction <add>, %23, %cst_17 [1] : vector<256x10xf32> to vector<256xf32>
    %25 = vector.shape_cast %24 : vector<256xf32> to vector<256x1xf32>
    %26 = math.log %25 : vector<256x1xf32>
    %c0_18 = arith.constant 0 : index
    %c0_19 = arith.constant 0 : index
    %27 = vector.load %arg8[%c0_18, %c0_19] : memref<256x1xf32, #tpu.memory_space<vmem>>, vector<256x1xf32>
    tpu.vector_store %arg8[%c0_18, %c0_19], %26 {strides = array<i32>} : memref<256x1xf32, #tpu.memory_space<vmem>>, vector<256x1xf32>,
    return
  }
  func.func @transform_0(%arg0: i32) -> (i32, i32) {
    %c0_i32 = arith.constant 0 : i32
    %c0_i32_0 = arith.constant 0 : i32
    return %arg0, %c0_i32 : i32, i32
  }
  func.func @transform_1(%arg0: i32) -> (i32, i32) {
    %c0_i32 = arith.constant 0 : i32
    %c0_i32_0 = arith.constant 0 : i32
    %c0_i32_1 = arith.constant 0 : i32
    return %c0_i32, %c0_i32_0 : i32, i32
  }
  func.func @transform_2(%arg0: i32) -> (i32, i32) {
    %c0_i32 = arith.constant 0 : i32
    %c0_i32_0 = arith.constant 0 : i32
    %c0_i32_1 = arith.constant 0 : i32
    return %c0_i32, %c0_i32_0 : i32, i32
  }
  func.func @transform_3(%arg0: i32) -> (i32, i32) {
    %c0_i32 = arith.constant 0 : i32
    %c0_i32_0 = arith.constant 0 : i32
    %c0_i32_1 = arith.constant 0 : i32
    return %c0_i32, %c0_i32_0 : i32, i32
  }
  func.func @transform_4(%arg0: i32) -> (i32, i32) {
    %c0_i32 = arith.constant 0 : i32
    %c0_i32_0 = arith.constant 0 : i32
    %c0_i32_1 = arith.constant 0 : i32
    return %c0_i32, %c0_i32_0 : i32, i32
  }
  func.func @transform_5(%arg0: i32) -> (i32, i32) {
    %c0_i32 = arith.constant 0 : i32
    %c0_i32_0 = arith.constant 0 : i32
    %c0_i32_1 = arith.constant 0 : i32
    return %c0_i32, %c0_i32_0 : i32, i32
  }
  func.func @transform_6(%arg0: i32) -> (i32, i32) {
    %c0_i32 = arith.constant 0 : i32
    %c0_i32_0 = arith.constant 0 : i32
    %c0_i32_1 = arith.constant 0 : i32
    return %c0_i32, %c0_i32_0 : i32, i32
  }
  func.func @transform_7(%arg0: i32) -> (i32, i32) {
    %c0_i32 = arith.constant 0 : i32
    %c0_i32_0 = arith.constant 0 : i32
    return %arg0, %c0_i32 : i32, i32
  }
}

</mosaic_0001>

<llo_original>
// kernel: tpu_custom_call.1
$region0: #{tpu_custom_call.1}
  #allocation0 [shape = 'u32[]', space=smem, size = 0x4, offset = 0x4, fixed_abs, tag = 'smem constant byte address 0x4 - core index']
  #allocation1 [shape = 'u32[144,128]{1,0:T(1,128)}', space=vmem, size = 0x12000, scoped, tag = 'internal scratch']
  %s0 = inlined_call_operand.vmem [shape: f32[1024,784], index: 0, kind: input, shape index: {}]
  %s1 = inlined_call_operand.vmem [shape: bf16[784,32], index: 1, kind: input, shape index: {}]
  %s2 = inlined_call_operand.vmem [shape: f32[1,32], index: 2, kind: input, shape index: {}]
  %s3 = inlined_call_operand.vmem [shape: bf16[32,32], index: 3, kind: input, shape index: {}]
  %s4 = inlined_call_operand.vmem [shape: f32[1,32], index: 4, kind: input, shape index: {}]
  %s5 = inlined_call_operand.vmem [shape: bf16[32,10], index: 5, kind: input, shape index: {}]
  %s6 = inlined_call_operand.vmem [shape: f32[1,10], index: 6, kind: input, shape index: {}]
  %s7 = inlined_call_operand.vmem [shape: f32[1024,1], index: 7, kind: output, shape index: {}]
  %s8 = sld [smem:[#allocation0]]
  $region61: #{tpu_custom_call.1} parent=0
    _
  %s10 = ssub.s32 1, %s8
  %s11 = scalar_select 0, %s10, %s8
  loop: start=0, step=1, limit=6
  $region2: #{tpu_custom_call.1} parent=0 // loop_pre_header
    _
  $region3: #{tpu_custom_call.1} parent=0 // loop_header
    %s13 = sphi 0, %s17
    %p14 = scmp.ge.s32.totalorder %s13, 6
    %s23 = sphi 0, %s25
    %s26 = sphi 0, %s23
    %s27 = sphi 0, %s26
    %s43 = sphi 0, %s27
    %s47 = sphi 0, %s47
    %s49 = sphi 0, %s47
    %s50 = sphi 0, %s49
    %s64 = sphi 0, %s50
    %s68 = sphi 0, %s68
    %s70 = sphi 0, %s68
    %s71 = sphi 0, %s70
    %s85 = sphi 0, %s71
    %s89 = sphi 0, %s89
    %s91 = sphi 0, %s89
    %s92 = sphi 0, %s91
    %s106 = sphi 0, %s92
    %s110 = sphi 0, %s110
    %s112 = sphi 0, %s110
    %s113 = sphi 0, %s112
    %s127 = sphi 0, %s113
    %s131 = sphi 0, %s131
    %s133 = sphi 0, %s131
    %s134 = sphi 0, %s133
    %s148 = sphi 0, %s134
    %s152 = sphi 0, %s152
    %s154 = sphi 0, %s152
    %s155 = sphi 0, %s154
    %s169 = sphi 0, %s155
    %s175 = sphi 0, %s177
    %s178 = sphi 0, %s175
    %s179 = sphi 0, %s178
    %s195 = sphi 0, %s179
  $region4: #{tpu_custom_call.1} parent=0 // loop_header_branch
    %16 = sbr.rel (%p14) target = $region8
  $region5: #{tpu_custom_call.1} parent=0 // loop_body
    %s18 = ssub.s32 %s13, 1
    %s19 = ssub.s32 %s13, 2
    %s20 = sadd.s32 %s13, 1
    %s21 = ssub.s32 %s13, %s20
    %p22 = scmp.eq.s32.totalorder %s21, 0
    %s24 = sadd.s32 %s23, 1
    %s25 = scalar_select %p22, %s23, %s24
    %p28 = pneg %p22
    %p29 = scmp.eq.s32.totalorder %s13, 3
    %p30 = por %p28, %p29
    %p31 = scmp.ne.s32.totalorder %s23, %s26
    %p32 = scmp.eq.s32.totalorder %s13, 0
    %p33 = por %p31, %p32
    %p34 = scmp.ne.s32.totalorder %s23, %s26
    %p35 = scmp.eq.s32.totalorder %s18, 3
    %p36 = por %p34, %p35
    %p37 = scmp.ne.s32.totalorder %s26, %s27
    %p38 = scmp.eq.s32.totalorder %s18, 0
    %p39 = por %p37, %p38
    %p40 = scmp.ne.s32.totalorder %s26, %s27
    %p41 = scmp.eq.s32.totalorder %s19, 3
    %p42 = por %p40, %p41
    %p44 = scmp.ne.s32.totalorder %s27, %s43
    %p45 = scmp.eq.s32.totalorder %s19, 0
    %p46 = por %p44, %p45
    %s48 = sadd.s32 %s47, 1
    %p51 = scmp.eq.s32.totalorder %s13, 3
    %p52 = scmp.ne.s32.totalorder %s47, %s49
    %p53 = scmp.eq.s32.totalorder %s13, 0
    %p54 = por %p52, %p53
    %p55 = scmp.ne.s32.totalorder %s47, %s49
    %p56 = scmp.eq.s32.totalorder %s18, 3
    %p57 = por %p55, %p56
    %p58 = scmp.ne.s32.totalorder %s49, %s50
    %p59 = scmp.eq.s32.totalorder %s18, 0
    %p60 = por %p58, %p59
    %p61 = scmp.ne.s32.totalorder %s49, %s50
    %p62 = scmp.eq.s32.totalorder %s19, 3
    %p63 = por %p61, %p62
    %p65 = scmp.ne.s32.totalorder %s50, %s64
    %p66 = scmp.eq.s32.totalorder %s19, 0
    %p67 = por %p65, %p66
    %s69 = sadd.s32 %s68, 1
    %p72 = scmp.eq.s32.totalorder %s13, 3
    %p73 = scmp.ne.s32.totalorder %s68, %s70
    %p74 = scmp.eq.s32.totalorder %s13, 0
    %p75 = por %p73, %p74
    %p76 = scmp.ne.s32.totalorder %s68, %s70
    %p77 = scmp.eq.s32.totalorder %s18, 3
    %p78 = por %p76, %p77
    %p79 = scmp.ne.s32.totalorder %s70, %s71
    %p80 = scmp.eq.s32.totalorder %s18, 0
    %p81 = por %p79, %p80
    %p82 = scmp.ne.s32.totalorder %s70, %s71
    %p83 = scmp.eq.s32.totalorder %s19, 3
    %p84 = por %p82, %p83
    %p86 = scmp.ne.s32.totalorder %s71, %s85
    %p87 = scmp.eq.s32.totalorder %s19, 0
    %p88 = por %p86, %p87
    %s90 = sadd.s32 %s89, 1
    %p93 = scmp.eq.s32.totalorder %s13, 3
    %p94 = scmp.ne.s32.totalorder %s89, %s91
    %p95 = scmp.eq.s32.totalorder %s13, 0
    %p96 = por %p94, %p95
    %p97 = scmp.ne.s32.totalorder %s89, %s91
    %p98 = scmp.eq.s32.totalorder %s18, 3
    %p99 = por %p97, %p98
    %p100 = scmp.ne.s32.totalorder %s91, %s92
    %p101 = scmp.eq.s32.totalorder %s18, 0
    %p102 = por %p100, %p101
    %p103 = scmp.ne.s32.totalorder %s91, %s92
    %p104 = scmp.eq.s32.totalorder %s19, 3
    %p105 = por %p103, %p104
    %p107 = scmp.ne.s32.totalorder %s92, %s106
    %p108 = scmp.eq.s32.totalorder %s19, 0
    %p109 = por %p107, %p108
    %s111 = sadd.s32 %s110, 1
    %p114 = scmp.eq.s32.totalorder %s13, 3
    %p115 = scmp.ne.s32.totalorder %s110, %s112
    %p116 = scmp.eq.s32.totalorder %s13, 0
    %p117 = por %p115, %p116
    %p118 = scmp.ne.s32.totalorder %s110, %s112
    %p119 = scmp.eq.s32.totalorder %s18, 3
    %p120 = por %p118, %p119
    %p121 = scmp.ne.s32.totalorder %s112, %s113
    %p122 = scmp.eq.s32.totalorder %s18, 0
    %p123 = por %p121, %p122
    %p124 = scmp.ne.s32.totalorder %s112, %s113
    %p125 = scmp.eq.s32.totalorder %s19, 3
    %p126 = por %p124, %p125
    %p128 = scmp.ne.s32.totalorder %s113, %s127
    %p129 = scmp.eq.s32.totalorder %s19, 0
    %p130 = por %p128, %p129
    %s132 = sadd.s32 %s131, 1
    %p135 = scmp.eq.s32.totalorder %s13, 3
    %p136 = scmp.ne.s32.totalorder %s131, %s133
    %p137 = scmp.eq.s32.totalorder %s13, 0
    %p138 = por %p136, %p137
    %p139 = scmp.ne.s32.totalorder %s131, %s133
    %p140 = scmp.eq.s32.totalorder %s18, 3
    %p141 = por %p139, %p140
    %p142 = scmp.ne.s32.totalorder %s133, %s134
    %p143 = scmp.eq.s32.totalorder %s18, 0
    %p144 = por %p142, %p143
    %p145 = scmp.ne.s32.totalorder %s133, %s134
    %p146 = scmp.eq.s32.totalorder %s19, 3
    %p147 = por %p145, %p146
    %p149 = scmp.ne.s32.totalorder %s134, %s148
    %p150 = scmp.eq.s32.totalorder %s19, 0
    %p151 = por %p149, %p150
    %s153 = sadd.s32 %s152, 1
    %p156 = scmp.eq.s32.totalorder %s13, 3
    %p157 = scmp.ne.s32.totalorder %s152, %s154
    %p158 = scmp.eq.s32.totalorder %s13, 0
    %p159 = por %p157, %p158
    %p160 = scmp.ne.s32.totalorder %s152, %s154
    %p161 = scmp.eq.s32.totalorder %s18, 3
    %p162 = por %p160, %p161
    %p163 = scmp.ne.s32.totalorder %s154, %s155
    %p164 = scmp.eq.s32.totalorder %s18, 0
    %p165 = por %p163, %p164
    %p166 = scmp.ne.s32.totalorder %s154, %s155
    %p167 = scmp.eq.s32.totalorder %s19, 3
    %p168 = por %p166, %p167
    %p170 = scmp.ne.s32.totalorder %s155, %s169
    %p171 = scmp.eq.s32.totalorder %s19, 0
    %p172 = por %p170, %p171
    %s173 = ssub.s32 %s13, %s20
    %p174 = scmp.eq.s32.totalorder %s173, 0
    %s176 = sadd.s32 %s175, 1
    %s177 = scalar_select %p174, %s175, %s176
    %p180 = pneg %p174
    %p181 = scmp.eq.s32.totalorder %s13, 3
    %p182 = por %p180, %p181
    %p183 = scmp.ne.s32.totalorder %s175, %s178
    %p184 = scmp.eq.s32.totalorder %s13, 0
    %p185 = por %p183, %p184
    %p186 = scmp.ne.s32.totalorder %s175, %s178
    %p187 = scmp.eq.s32.totalorder %s18, 3
    %p188 = por %p186, %p187
    %p189 = scmp.ne.s32.totalorder %s178, %s179
    %p190 = scmp.eq.s32.totalorder %s18, 0
    %p191 = por %p189, %p190
    %p192 = scmp.ne.s32.totalorder %s178, %s179
    %p193 = scmp.eq.s32.totalorder %s19, 3
    %p194 = por %p192, %p193
    %p196 = scmp.ne.s32.totalorder %s179, %s195
    %p197 = scmp.eq.s32.totalorder %s19, 0
    %p198 = por %p196, %p197
    %p199 = scmp.le.s32.totalorder 1, %s13
    %p200 = scmp.lt.s32.totalorder %s13, 5
    %p201 = pnand %p199, %p200
    %p202 = pneg %p201
    // Predicated region
    $region9: #{tpu_custom_call.1} parent=5 // pred_check
      _
    $region10: #{tpu_custom_call.1} parent=5 // pred_check_branch
      %204 = sbr.rel (%p201) target = $region12
    $region11: #{tpu_custom_call.1} parent=5 // pred_region
      %s205 = ssub.s32 %s13, 1
      // Predicated region
      $region13: #{tpu_custom_call.1} parent=11 // pred_check
        %p206 = pneg %p60
      $region14: #{tpu_custom_call.1} parent=11 // pred_check_branch
        %208 = sbr.rel (%p206) target = $region16
      $region15: #{tpu_custom_call.1} parent=11 // pred_region
        _
      $region16: #{tpu_custom_call.1} parent=11 // pred_fallthru
        _
      // Predicated region
      $region17: #{tpu_custom_call.1} parent=11 // pred_check
        %p209 = pneg %p81
      $region18: #{tpu_custom_call.1} parent=11 // pred_check_branch
        %211 = sbr.rel (%p209) target = $region20
      $region19: #{tpu_custom_call.1} parent=11 // pred_region
        _
      $region20: #{tpu_custom_call.1} parent=11 // pred_fallthru
        _
      // Predicated region
      $region21: #{tpu_custom_call.1} parent=11 // pred_check
        %p212 = pneg %p102
      $region22: #{tpu_custom_call.1} parent=11 // pred_check_branch
        %214 = sbr.rel (%p212) target = $region24
      $region23: #{tpu_custom_call.1} parent=11 // pred_region
        _
      $region24: #{tpu_custom_call.1} parent=11 // pred_fallthru
        _
      // Predicated region
      $region25: #{tpu_custom_call.1} parent=11 // pred_check
        %p215 = pneg %p123
      $region26: #{tpu_custom_call.1} parent=11 // pred_check_branch
        %217 = sbr.rel (%p215) target = $region28
      $region27: #{tpu_custom_call.1} parent=11 // pred_region
        _
      $region28: #{tpu_custom_call.1} parent=11 // pred_fallthru
        _
      // Predicated region
      $region29: #{tpu_custom_call.1} parent=11 // pred_check
        %p218 = pneg %p144
      $region30: #{tpu_custom_call.1} parent=11 // pred_check_branch
        %220 = sbr.rel (%p218) target = $region32
      $region31: #{tpu_custom_call.1} parent=11 // pred_region
        _
      $region32: #{tpu_custom_call.1} parent=11 // pred_fallthru
        _
      // Predicated region
      $region33: #{tpu_custom_call.1} parent=11 // pred_check
        %p221 = pneg %p165
      $region34: #{tpu_custom_call.1} parent=11 // pred_check_branch
        %223 = sbr.rel (%p221) target = $region36
      $region35: #{tpu_custom_call.1} parent=11 // pred_region
        _
      $region36: #{tpu_custom_call.1} parent=11 // pred_fallthru
        _
    $region12: #{tpu_custom_call.1} parent=5 // pred_fallthru
      _
    %p224 = scmp.lt.s32.totalorder %s13, 4
    // Predicated region
    $region37: #{tpu_custom_call.1} parent=5 // pred_check
      %p225 = pneg %p224
    $region38: #{tpu_custom_call.1} parent=5 // pred_check_branch
      %227 = sbr.rel (%p225) target = $region40
    $region39: #{tpu_custom_call.1} parent=5 // pred_region
      // Predicated region
      $region41: #{tpu_custom_call.1} parent=39 // pred_check
        %p228 = pneg %p33
      $region42: #{tpu_custom_call.1} parent=39 // pred_check_branch
        %230 = sbr.rel (%p228) target = $region44
      $region43: #{tpu_custom_call.1} parent=39 // pred_region
        %s231 = smul.u32 32, %s13
        %p232 = scmp.lt.s32.totalorder %s231, 127
        %s233 = scalar_select %p232, %s231, 127
        %s234 = smul.addr %s233, 7
        %s235 = smul.addr %s234, 8
        %s236 = scalar_lea.vmem %s0, %s235
        %s237 = smul.u32 32, %s13
      $region44: #{tpu_custom_call.1} parent=39 // pred_fallthru
        _
    $region40: #{tpu_custom_call.1} parent=5 // pred_fallthru
      _
    %p238 = scmp.le.s32.totalorder 1, %s13
    %p239 = scmp.lt.s32.totalorder %s13, 5
    %p240 = pnand %p238, %p239
    %p241 = pneg %p240
    // Predicated region
    $region45: #{tpu_custom_call.1} parent=5 // pred_check
      _
    $region46: #{tpu_custom_call.1} parent=5 // pred_check_branch
      %243 = sbr.rel (%p240) target = $region48
    $region47: #{tpu_custom_call.1} parent=5 // pred_region
      %s244 = ssub.s32 %s13, 1
      %s245 = smul.u32 32, %s18
      %p246 = scmp.lt.s32.totalorder %s245, 127
      %s247 = scalar_select %p246, %s245, 127
      %s248 = smul.addr %s247, 7
      %s249 = smul.addr %s248, 8
      %s250 = scalar_lea.vmem %s0, %s249
      %p251 = pneg %p39
      %p252 = pneg %p36
      %p253 = pneg %p60
      %p254 = pneg %p57
      %p255 = pneg %p81
      %p256 = pneg %p78
      %p257 = pneg %p102
      %p258 = pneg %p99
      %p259 = pneg %p123
      %p260 = pneg %p120
      %p261 = pneg %p144
      %p262 = pneg %p141
      %p263 = pneg %p165
      %p264 = pneg %p162
      %p265 = pneg %p191
      %p266 = pneg %p188
      %s267 = smul.u32 32, %s18
      %p268 = scmp.lt.s32.totalorder %s267, 127
      %s269 = scalar_select %p268, %s267, 127
      %s270 = smul.addr %s269, 8
      %s271 = scalar_lea.vmem %s7, %s270
      %s272 = smul.u32 32, %s18
      %p273 = scmp.lt.s32.totalorder %s272, 127
      %s274 = scalar_select %p273, %s272, 127
      %s275 = smul.addr %s274, 7
      %s276 = smul.addr %s275, 8
      %s277 = scalar_lea.vmem %s0, %s276
      %s278 = smul.u32 32, %s18
      %s279 = smul.u32 32, %s18
      %p280 = scmp.lt.s32.totalorder %s279, 127
      %s281 = scalar_select %p280, %s279, 127
      %s282 = smul.addr %s281, 8
      %s283 = scalar_lea.vmem %s7, %s282
      %s284 = smul.u32 32, %s18
      %v286 = vld [vmem:[%s277] sm:$0xff]
      %v287 = vld [vmem:[%s277 + $0x8] sm:$0xff]
      %v288 = vld [vmem:[%s277 + $0x10] sm:$0xff]
      %v289 = vld [vmem:[%s277 + $0x18] sm:$0xff]
      %v290 = vld [vmem:[%s277 + $0x20] sm:$0xff]
      %v291 = vld [vmem:[%s277 + $0x28] sm:$0xff]
      %v292 = vld [vmem:[%s277 + $0x30] sm:$0xff]
      %v293 = vld [vmem:[%s277 + $0x38] sm:$0xff]
      %v294 = vld [vmem:[%s277 + $0x40] sm:$0xff]
      %v295 = vld [vmem:[%s277 + $0x48] sm:$0xff]
      %v296 = vld [vmem:[%s277 + $0x50] sm:$0xff]
      %v297 = vld [vmem:[%s277 + $0x58] sm:$0xff]
      %v298 = vld [vmem:[%s277 + $0x60] sm:$0xff]
      %v299 = vld [vmem:[%s277 + $0x68] sm:$0xff]
      %v300 = vld [vmem:[%s277 + $0x70] sm:$0xff]
      %v301 = vld [vmem:[%s277 + $0x78] sm:$0xff]
      %v302 = vld [vmem:[%s277 + $0x80] sm:$0xff]
      %v303 = vld [vmem:[%s277 + $0x88] sm:$0xff]
      %v304 = vld [vmem:[%s277 + $0x90] sm:$0xff]
      %v305 = vld [vmem:[%s277 + $0x98] sm:$0xff]
      %v306 = vld [vmem:[%s277 + $0xa0] sm:$0xff]
      %v307 = vld [vmem:[%s277 + $0xa8] sm:$0xff]
      %v308 = vld [vmem:[%s277 + $0xb0] sm:$0xff]
      %v309 = vld [vmem:[%s277 + $0xb8] sm:$0xff]
      %v310 = vld [vmem:[%s277 + $0xc0] sm:$0xff]
      %v311 = vld [vmem:[%s277 + $0xc8] sm:$0xff]
      %v312 = vld [vmem:[%s277 + $0xd0] sm:$0xff]
      %v313 = vld [vmem:[%s277 + $0xd8] sm:$0xff]
      %v314 = vld [vmem:[%s277 + $0xe0] sm:$0xff]
      %v315 = vld [vmem:[%s277 + $0xe8] sm:$0xff]
      %v316 = vld [vmem:[%s277 + $0xf0] sm:$0xff]
      %v317 = vld [vmem:[%s277 + $0xf8] sm:$0xff]
      %v318 = vld [vmem:[%s277 + $0x100] sm:$0xff]
      %v319 = vld [vmem:[%s277 + $0x108] sm:$0xff]
      %v320 = vld [vmem:[%s277 + $0x110] sm:$0xff]
      %v321 = vld [vmem:[%s277 + $0x118] sm:$0xff]
      %v322 = vld [vmem:[%s277 + $0x120] sm:$0xff]
      %v323 = vld [vmem:[%s277 + $0x128] sm:$0xff]
      %v324 = vld [vmem:[%s277 + $0x130] sm:$0xff]
      %v325 = vld [vmem:[%s277 + $0x138] sm:$0xff]
      %v326 = vld [vmem:[%s277 + $0x140] sm:$0xff]
      %v327 = vld [vmem:[%s277 + $0x148] sm:$0xff]
      %v328 = vld [vmem:[%s277 + $0x150] sm:$0xff]
      %v329 = vld [vmem:[%s277 + $0x158] sm:$0xff]
      %v330 = vld [vmem:[%s277 + $0x160] sm:$0xff]
      %v331 = vld [vmem:[%s277 + $0x168] sm:$0xff]
      %v332 = vld [vmem:[%s277 + $0x170] sm:$0xff]
      %v333 = vld [vmem:[%s277 + $0x178] sm:$0xff]
      %v334 = vld [vmem:[%s277 + $0x180] sm:$0xff]
      %v335 = vld [vmem:[%s277 + $0x188] sm:$0xff]
      %v336 = vld [vmem:[%s277 + $0x190] sm:$0xff]
      %v337 = vld [vmem:[%s277 + $0x198] sm:$0xff]
      %v338 = vld [vmem:[%s277 + $0x1a0] sm:$0xff]
      %v339 = vld [vmem:[%s277 + $0x1a8] sm:$0xff]
      %v340 = vld [vmem:[%s277 + $0x1b0] sm:$0xff]
      %v341 = vld [vmem:[%s277 + $0x1b8] sm:$0xff]
      %v342 = vld [vmem:[%s277 + $0x1c0] sm:$0xff]
      %v343 = vld [vmem:[%s277 + $0x1c8] sm:$0xff]
      %v344 = vld [vmem:[%s277 + $0x1d0] sm:$0xff]
      %v345 = vld [vmem:[%s277 + $0x1d8] sm:$0xff]
      %v346 = vld [vmem:[%s277 + $0x1e0] sm:$0xff]
      %v347 = vld [vmem:[%s277 + $0x1e8] sm:$0xff]
      %v348 = vld [vmem:[%s277 + $0x1f0] sm:$0xff]
      %v349 = vld [vmem:[%s277 + $0x1f8] sm:$0xff]
      %v350 = vld [vmem:[%s277 + $0x200] sm:$0xff]
      %v351 = vld [vmem:[%s277 + $0x208] sm:$0xff]
      %v352 = vld [vmem:[%s277 + $0x210] sm:$0xff]
      %v353 = vld [vmem:[%s277 + $0x218] sm:$0xff]
      %v354 = vld [vmem:[%s277 + $0x220] sm:$0xff]
      %v355 = vld [vmem:[%s277 + $0x228] sm:$0xff]
      %v356 = vld [vmem:[%s277 + $0x230] sm:$0xff]
      %v357 = vld [vmem:[%s277 + $0x238] sm:$0xff]
      %v358 = vld [vmem:[%s277 + $0x240] sm:$0xff]
      %v359 = vld [vmem:[%s277 + $0x248] sm:$0xff]
      %v360 = vld [vmem:[%s277 + $0x250] sm:$0xff]
      %v361 = vld [vmem:[%s277 + $0x258] sm:$0xff]
      %v362 = vld [vmem:[%s277 + $0x260] sm:$0xff]
      %v363 = vld [vmem:[%s277 + $0x268] sm:$0xff]
      %v364 = vld [vmem:[%s277 + $0x270] sm:$0xff]
      %v365 = vld [vmem:[%s277 + $0x278] sm:$0xff]
      %v366 = vld [vmem:[%s277 + $0x280] sm:$0xff]
      %v367 = vld [vmem:[%s277 + $0x288] sm:$0xff]
      %v368 = vld [vmem:[%s277 + $0x290] sm:$0xff]
      %v369 = vld [vmem:[%s277 + $0x298] sm:$0xff]
      %v370 = vld [vmem:[%s277 + $0x2a0] sm:$0xff]
      %v371 = vld [vmem:[%s277 + $0x2a8] sm:$0xff]
      %v372 = vld [vmem:[%s277 + $0x2b0] sm:$0xff]
      %v373 = vld [vmem:[%s277 + $0x2b8] sm:$0xff]
      %v374 = vld [vmem:[%s277 + $0x2c0] sm:$0xff]
      %v375 = vld [vmem:[%s277 + $0x2c8] sm:$0xff]
      %v376 = vld [vmem:[%s277 + $0x2d0] sm:$0xff]
      %v377 = vld [vmem:[%s277 + $0x2d8] sm:$0xff]
      %v378 = vld [vmem:[%s277 + $0x2e0] sm:$0xff]
      %v379 = vld [vmem:[%s277 + $0x2e8] sm:$0xff]
      %v380 = vld [vmem:[%s277 + $0x2f0] sm:$0xff]
      %v381 = vld [vmem:[%s277 + $0x2f8] sm:$0xff]
      %v382 = vld [vmem:[%s277 + $0x300] sm:$0xff]
      %v383 = vld [vmem:[%s277 + $0x308] sm:$0xff]
      %v384 = vld [vmem:[%s277 + $0x310] sm:$0xff]
      %v385 = vld [vmem:[%s277 + $0x318] sm:$0xff]
      %v386 = vld [vmem:[%s277 + $0x320] sm:$0xff]
      %v387 = vld [vmem:[%s277 + $0x328] sm:$0xff]
      %v388 = vld [vmem:[%s277 + $0x330] sm:$0xff]
      %v389 = vld [vmem:[%s277 + $0x338] sm:$0xff]
      %v390 = vld [vmem:[%s277 + $0x340] sm:$0xff]
      %v391 = vld [vmem:[%s277 + $0x348] sm:$0xff]
      %v392 = vld [vmem:[%s277 + $0x350] sm:$0xff]
      %v393 = vld [vmem:[%s277 + $0x358] sm:$0xff]
      %v394 = vld [vmem:[%s277 + $0x360] sm:$0xff]
      %v395 = vld [vmem:[%s277 + $0x368] sm:$0xff]
      %v396 = vld [vmem:[%s277 + $0x370] sm:$0xff]
      %v397 = vld [vmem:[%s277 + $0x378] sm:$0xff]
      %v398 = vld [vmem:[%s277 + $0x380] sm:$0xff]
      %v399 = vld [vmem:[%s277 + $0x388] sm:$0xff]
      %v400 = vld [vmem:[%s277 + $0x390] sm:$0xff]
      %v401 = vld [vmem:[%s277 + $0x398] sm:$0xff]
      %v402 = vld [vmem:[%s277 + $0x3a0] sm:$0xff]
      %v403 = vld [vmem:[%s277 + $0x3a8] sm:$0xff]
      %v404 = vld [vmem:[%s277 + $0x3b0] sm:$0xff]
      %v405 = vld [vmem:[%s277 + $0x3b8] sm:$0xff]
      %v406 = vld [vmem:[%s277 + $0x3c0] sm:$0xff]
      %v407 = vld [vmem:[%s277 + $0x3c8] sm:$0xff]
      %v408 = vld [vmem:[%s277 + $0x3d0] sm:$0xff]
      %v409 = vld [vmem:[%s277 + $0x3d8] sm:$0xff]
      %v410 = vld [vmem:[%s277 + $0x3e0] sm:$0xff]
      %v411 = vld [vmem:[%s277 + $0x3e8] sm:$0xff]
      %v412 = vld [vmem:[%s277 + $0x3f0] sm:$0xff]
      %v413 = vld [vmem:[%s277 + $0x3f8] sm:$0xff]
      %v414 = vld [vmem:[%s277 + $0x400] sm:$0xff]
      %v415 = vld [vmem:[%s277 + $0x408] sm:$0xff]
      %v416 = vld [vmem:[%s277 + $0x410] sm:$0xff]
      %v417 = vld [vmem:[%s277 + $0x418] sm:$0xff]
      %v418 = vld [vmem:[%s277 + $0x420] sm:$0xff]
      %v419 = vld [vmem:[%s277 + $0x428] sm:$0xff]
      %v420 = vld [vmem:[%s277 + $0x430] sm:$0xff]
      %v421 = vld [vmem:[%s277 + $0x438] sm:$0xff]
      %v422 = vld [vmem:[%s277 + $0x440] sm:$0xff]
      %v423 = vld [vmem:[%s277 + $0x448] sm:$0xff]
      %v424 = vld [vmem:[%s277 + $0x450] sm:$0xff]
      %v425 = vld [vmem:[%s277 + $0x458] sm:$0xff]
      %v426 = vld [vmem:[%s277 + $0x460] sm:$0xff]
      %v427 = vld [vmem:[%s277 + $0x468] sm:$0xff]
      %v428 = vld [vmem:[%s277 + $0x470] sm:$0xff]
      %v429 = vld [vmem:[%s277 + $0x478] sm:$0xff]
      %v430 = vld [vmem:[%s277 + $0x480] sm:$0xff]
      %v431 = vld [vmem:[%s277 + $0x488] sm:$0xff]
      %v432 = vld [vmem:[%s277 + $0x490] sm:$0xff]
      %v433 = vld [vmem:[%s277 + $0x498] sm:$0xff]
      %v434 = vld [vmem:[%s277 + $0x4a0] sm:$0xff]
      %v435 = vld [vmem:[%s277 + $0x4a8] sm:$0xff]
      %v436 = vld [vmem:[%s277 + $0x4b0] sm:$0xff]
      %v437 = vld [vmem:[%s277 + $0x4b8] sm:$0xff]
      %v438 = vld [vmem:[%s277 + $0x4c0] sm:$0xff]
      %v439 = vld [vmem:[%s277 + $0x4c8] sm:$0xff]
      %v440 = vld [vmem:[%s277 + $0x4d0] sm:$0xff]
      %v441 = vld [vmem:[%s277 + $0x4d8] sm:$0xff]
      %v442 = vld [vmem:[%s277 + $0x4e0] sm:$0xff]
      %v443 = vld [vmem:[%s277 + $0x4e8] sm:$0xff]
      %v444 = vld [vmem:[%s277 + $0x4f0] sm:$0xff]
      %v445 = vld [vmem:[%s277 + $0x4f8] sm:$0xff]
      %v446 = vld [vmem:[%s277 + $0x500] sm:$0xff]
      %v447 = vld [vmem:[%s277 + $0x508] sm:$0xff]
      %v448 = vld [vmem:[%s277 + $0x510] sm:$0xff]
      %v449 = vld [vmem:[%s277 + $0x518] sm:$0xff]
      %v450 = vld [vmem:[%s277 + $0x520] sm:$0xff]
      %v451 = vld [vmem:[%s277 + $0x528] sm:$0xff]
      %v452 = vld [vmem:[%s277 + $0x530] sm:$0xff]
      %v453 = vld [vmem:[%s277 + $0x538] sm:$0xff]
      %v454 = vld [vmem:[%s277 + $0x540] sm:$0xff]
      %v455 = vld [vmem:[%s277 + $0x548] sm:$0xff]
      %v456 = vld [vmem:[%s277 + $0x550] sm:$0xff]
      %v457 = vld [vmem:[%s277 + $0x558] sm:$0xff]
      %v458 = vld [vmem:[%s277 + $0x560] sm:$0xff]
      %v459 = vld [vmem:[%s277 + $0x568] sm:$0xff]
      %v460 = vld [vmem:[%s277 + $0x570] sm:$0xff]
      %v461 = vld [vmem:[%s277 + $0x578] sm:$0xff]
      %v462 = vld [vmem:[%s277 + $0x580] sm:$0xff]
      %v463 = vld [vmem:[%s277 + $0x588] sm:$0xff]
      %v464 = vld [vmem:[%s277 + $0x590] sm:$0xff]
      %v465 = vld [vmem:[%s277 + $0x598] sm:$0xff]
      %v466 = vld [vmem:[%s277 + $0x5a0] sm:$0xff]
      %v467 = vld [vmem:[%s277 + $0x5a8] sm:$0xff]
      %v468 = vld [vmem:[%s277 + $0x5b0] sm:$0xff]
      %v469 = vld [vmem:[%s277 + $0x5b8] sm:$0xff]
      %v470 = vld [vmem:[%s277 + $0x5c0] sm:$0xff]
      %v471 = vld [vmem:[%s277 + $0x5c8] sm:$0xff]
      %v472 = vld [vmem:[%s277 + $0x5d0] sm:$0xff]
      %v473 = vld [vmem:[%s277 + $0x5d8] sm:$0xff]
      %v474 = vld [vmem:[%s277 + $0x5e0] sm:$0xff]
      %v475 = vld [vmem:[%s277 + $0x5e8] sm:$0xff]
      %v476 = vld [vmem:[%s277 + $0x5f0] sm:$0xff]
      %v477 = vld [vmem:[%s277 + $0x5f8] sm:$0xff]
      %v478 = vld [vmem:[%s277 + $0x600] sm:$0xff]
      %v479 = vld [vmem:[%s277 + $0x608] sm:$0xff]
      %v480 = vld [vmem:[%s277 + $0x610] sm:$0xff]
      %v481 = vld [vmem:[%s277 + $0x618] sm:$0xff]
      %v482 = vld [vmem:[%s277 + $0x620] sm:$0xff]
      %v483 = vld [vmem:[%s277 + $0x628] sm:$0xff]
      %v484 = vld [vmem:[%s277 + $0x630] sm:$0xff]
      %v485 = vld [vmem:[%s277 + $0x638] sm:$0xff]
      %v486 = vld [vmem:[%s277 + $0x640] sm:$0xff]
      %v487 = vld [vmem:[%s277 + $0x648] sm:$0xff]
      %v488 = vld [vmem:[%s277 + $0x650] sm:$0xff]
      %v489 = vld [vmem:[%s277 + $0x658] sm:$0xff]
      %v490 = vld [vmem:[%s277 + $0x660] sm:$0xff]
      %v491 = vld [vmem:[%s277 + $0x668] sm:$0xff]
      %v492 = vld [vmem:[%s277 + $0x670] sm:$0xff]
      %v493 = vld [vmem:[%s277 + $0x678] sm:$0xff]
      %v494 = vld [vmem:[%s277 + $0x680] sm:$0xff]
      %v495 = vld [vmem:[%s277 + $0x688] sm:$0xff]
      %v496 = vld [vmem:[%s277 + $0x690] sm:$0xff]
      %v497 = vld [vmem:[%s277 + $0x698] sm:$0xff]
      %v498 = vld [vmem:[%s277 + $0x6a0] sm:$0xff]
      %v499 = vld [vmem:[%s277 + $0x6a8] sm:$0xff]
      %v500 = vld [vmem:[%s277 + $0x6b0] sm:$0xff]
      %v501 = vld [vmem:[%s277 + $0x6b8] sm:$0xff]
      %v502 = vld [vmem:[%s277 + $0x6c0] sm:$0xff]
      %v503 = vld [vmem:[%s277 + $0x6c8] sm:$0xff]
      %v504 = vld [vmem:[%s277 + $0x6d0] sm:$0xff]
      %v505 = vld [vmem:[%s277 + $0x6d8] sm:$0xff]
      %v506 = vld [vmem:[%s277 + $0x6e0] sm:$0xff]
      %v507 = vld [vmem:[%s277 + $0x6e8] sm:$0xff]
      %v508 = vld [vmem:[%s277 + $0x6f0] sm:$0xff]
      %v509 = vld [vmem:[%s277 + $0x6f8] sm:$0xff]
      %v510 = vpack.c.bf16 %v293, %v286
      %v511 = vpack.c.bf16 %v294, %v287
      %v512 = vpack.c.bf16 %v295, %v288
      %v513 = vpack.c.bf16 %v296, %v289
      %v514 = vpack.c.bf16 %v297, %v290
      %v515 = vpack.c.bf16 %v298, %v291
      %v516 = vpack.c.bf16 %v299, %v292
      %v517 = vpack.c.bf16 %v307, %v300
      %v518 = vpack.c.bf16 %v308, %v301
      %v519 = vpack.c.bf16 %v309, %v302
      %v520 = vpack.c.bf16 %v310, %v303
      %v521 = vpack.c.bf16 %v311, %v304
      %v522 = vpack.c.bf16 %v312, %v305
      %v523 = vpack.c.bf16 %v313, %v306
      %v524 = vpack.c.bf16 %v321, %v314
      %v525 = vpack.c.bf16 %v322, %v315
      %v526 = vpack.c.bf16 %v323, %v316
      %v527 = vpack.c.bf16 %v324, %v317
      %v528 = vpack.c.bf16 %v325, %v318
      %v529 = vpack.c.bf16 %v326, %v319
      %v530 = vpack.c.bf16 %v327, %v320
      %v531 = vpack.c.bf16 %v335, %v328
      %v532 = vpack.c.bf16 %v336, %v329
      %v533 = vpack.c.bf16 %v337, %v330
      %v534 = vpack.c.bf16 %v338, %v331
      %v535 = vpack.c.bf16 %v339, %v332
      %v536 = vpack.c.bf16 %v340, %v333
      %v537 = vpack.c.bf16 %v341, %v334
      %v538 = vpack.c.bf16 %v349, %v342
      %v539 = vpack.c.bf16 %v350, %v343
      %v540 = vpack.c.bf16 %v351, %v344
      %v541 = vpack.c.bf16 %v352, %v345
      %v542 = vpack.c.bf16 %v353, %v346
      %v543 = vpack.c.bf16 %v354, %v347
      %v544 = vpack.c.bf16 %v355, %v348
      %v545 = vpack.c.bf16 %v363, %v356
      %v546 = vpack.c.bf16 %v364, %v357
      %v547 = vpack.c.bf16 %v365, %v358
      %v548 = vpack.c.bf16 %v366, %v359
      %v549 = vpack.c.bf16 %v367, %v360
      %v550 = vpack.c.bf16 %v368, %v361
      %v551 = vpack.c.bf16 %v369, %v362
      %v552 = vpack.c.bf16 %v377, %v370
      %v553 = vpack.c.bf16 %v378, %v371
      %v554 = vpack.c.bf16 %v379, %v372
      %v555 = vpack.c.bf16 %v380, %v373
      %v556 = vpack.c.bf16 %v381, %v374
      %v557 = vpack.c.bf16 %v382, %v375
      %v558 = vpack.c.bf16 %v383, %v376
      %v559 = vpack.c.bf16 %v391, %v384
      %v560 = vpack.c.bf16 %v392, %v385
      %v561 = vpack.c.bf16 %v393, %v386
      %v562 = vpack.c.bf16 %v394, %v387
      %v563 = vpack.c.bf16 %v395, %v388
      %v564 = vpack.c.bf16 %v396, %v389
      %v565 = vpack.c.bf16 %v397, %v390
      %v566 = vpack.c.bf16 %v405, %v398
      %v567 = vpack.c.bf16 %v406, %v399
      %v568 = vpack.c.bf16 %v407, %v400
      %v569 = vpack.c.bf16 %v408, %v401
      %v570 = vpack.c.bf16 %v409, %v402
      %v571 = vpack.c.bf16 %v410, %v403
      %v572 = vpack.c.bf16 %v411, %v404
      %v573 = vpack.c.bf16 %v419, %v412
      %v574 = vpack.c.bf16 %v420, %v413
      %v575 = vpack.c.bf16 %v421, %v414
      %v576 = vpack.c.bf16 %v422, %v415
      %v577 = vpack.c.bf16 %v423, %v416
      %v578 = vpack.c.bf16 %v424, %v417
      %v579 = vpack.c.bf16 %v425, %v418
      %v580 = vpack.c.bf16 %v433, %v426
      %v581 = vpack.c.bf16 %v434, %v427
      %v582 = vpack.c.bf16 %v435, %v428
      %v583 = vpack.c.bf16 %v436, %v429
      %v584 = vpack.c.bf16 %v437, %v430
      %v585 = vpack.c.bf16 %v438, %v431
      %v586 = vpack.c.bf16 %v439, %v432
      %v587 = vpack.c.bf16 %v447, %v440
      %v588 = vpack.c.bf16 %v448, %v441
      %v589 = vpack.c.bf16 %v449, %v442
      %v590 = vpack.c.bf16 %v450, %v443
      %v591 = vpack.c.bf16 %v451, %v444
      %v592 = vpack.c.bf16 %v452, %v445
      %v593 = vpack.c.bf16 %v453, %v446
      %v594 = vpack.c.bf16 %v461, %v454
      %v595 = vpack.c.bf16 %v462, %v455
      %v596 = vpack.c.bf16 %v463, %v456
      %v597 = vpack.c.bf16 %v464, %v457
      %v598 = vpack.c.bf16 %v465, %v458
      %v599 = vpack.c.bf16 %v466, %v459
      %v600 = vpack.c.bf16 %v467, %v460
      %v601 = vpack.c.bf16 %v475, %v468
      %v602 = vpack.c.bf16 %v476, %v469
      %v603 = vpack.c.bf16 %v477, %v470
      %v604 = vpack.c.bf16 %v478, %v471
      %v605 = vpack.c.bf16 %v479, %v472
      %v606 = vpack.c.bf16 %v480, %v473
      %v607 = vpack.c.bf16 %v481, %v474
      %v608 = vpack.c.bf16 %v489, %v482
      %v609 = vpack.c.bf16 %v490, %v483
      %v610 = vpack.c.bf16 %v491, %v484
      %v611 = vpack.c.bf16 %v492, %v485
      %v612 = vpack.c.bf16 %v493, %v486
      %v613 = vpack.c.bf16 %v494, %v487
      %v614 = vpack.c.bf16 %v495, %v488
      %v615 = vpack.c.bf16 %v503, %v496
      %v616 = vpack.c.bf16 %v504, %v497
      %v617 = vpack.c.bf16 %v505, %v498
      %v618 = vpack.c.bf16 %v506, %v499
      %v619 = vpack.c.bf16 %v507, %v500
      %v620 = vpack.c.bf16 %v508, %v501
      %v621 = vpack.c.bf16 %v509, %v502
      %v622 = vld [vmem:[%s1] sm:$0xf]
      %v623 = vld [vmem:[%s1 + $0x4] sm:$0xf]
      %v624 = vld [vmem:[%s1 + $0x8] sm:$0xf]
      %v625 = vld [vmem:[%s1 + $0xc] sm:$0xf]
      %v626 = vld [vmem:[%s1 + $0x10] sm:$0xf]
      %v627 = vld [vmem:[%s1 + $0x14] sm:$0xf]
      %v628 = vld [vmem:[%s1 + $0x18] sm:$0xf]
      %v629 = vld [vmem:[%s1 + $0x1c] sm:$0xf]
      %v630 = vld [vmem:[%s1 + $0x20] sm:$0xf]
      %v631 = vld [vmem:[%s1 + $0x24] sm:$0xf]
      %v632 = vld [vmem:[%s1 + $0x28] sm:$0xf]
      %v633 = vld [vmem:[%s1 + $0x2c] sm:$0xf]
      %v634 = vld [vmem:[%s1 + $0x30] sm:$0xf]
      %v635 = vld [vmem:[%s1 + $0x34] sm:$0xf]
      %v636 = vld [vmem:[%s1 + $0x38] sm:$0xf]
      %v637 = vld [vmem:[%s1 + $0x3c] sm:$0xf]
      %v638 = vld [vmem:[%s1 + $0x40] sm:$0xf]
      %v639 = vld [vmem:[%s1 + $0x44] sm:$0xf]
      %v640 = vld [vmem:[%s1 + $0x48] sm:$0xf]
      %v641 = vld [vmem:[%s1 + $0x4c] sm:$0xf]
      %v642 = vld [vmem:[%s1 + $0x50] sm:$0xf]
      %v643 = vld [vmem:[%s1 + $0x54] sm:$0xf]
      %v644 = vld [vmem:[%s1 + $0x58] sm:$0xf]
      %v645 = vld [vmem:[%s1 + $0x5c] sm:$0xf]
      %v646 = vld [vmem:[%s1 + $0x60] sm:$0xf]
      %v647 = vld [vmem:[%s1 + $0x64] sm:$0xf]
      %v648 = vld [vmem:[%s1 + $0x68] sm:$0xf]
      %v649 = vld [vmem:[%s1 + $0x6c] sm:$0xf]
      %v650 = vld [vmem:[%s1 + $0x70] sm:$0xf]
      %v651 = vld [vmem:[%s1 + $0x74] sm:$0xf]
      %v652 = vld [vmem:[%s1 + $0x78] sm:$0xf]
      %v653 = vld [vmem:[%s1 + $0x7c] sm:$0xf]
      %v654 = vld [vmem:[%s1 + $0x80] sm:$0xf]
      %v655 = vld [vmem:[%s1 + $0x84] sm:$0xf]
      %v656 = vld [vmem:[%s1 + $0x88] sm:$0xf]
      %v657 = vld [vmem:[%s1 + $0x8c] sm:$0xf]
      %v658 = vld [vmem:[%s1 + $0x90] sm:$0xf]
      %v659 = vld [vmem:[%s1 + $0x94] sm:$0xf]
      %v660 = vld [vmem:[%s1 + $0x98] sm:$0xf]
      %v661 = vld [vmem:[%s1 + $0x9c] sm:$0xf]
      %v662 = vld [vmem:[%s1 + $0xa0] sm:$0xf]
      %v663 = vld [vmem:[%s1 + $0xa4] sm:$0xf]
      %v664 = vld [vmem:[%s1 + $0xa8] sm:$0xf]
      %v665 = vld [vmem:[%s1 + $0xac] sm:$0xf]
      %v666 = vld [vmem:[%s1 + $0xb0] sm:$0xf]
      %v667 = vld [vmem:[%s1 + $0xb4] sm:$0xf]
      %v668 = vld [vmem:[%s1 + $0xb8] sm:$0xf]
      %v669 = vld [vmem:[%s1 + $0xbc] sm:$0xf]
      %v670 = vld [vmem:[%s1 + $0xc0] sm:$0xf]
      %v671 = vld [vmem:[%s1 + $0xc4] sm:$0xf]
      %v672 = vld [vmem:[%s1 + $0xc8] sm:$0xf]
      %v673 = vld [vmem:[%s1 + $0xcc] sm:$0xf]
      %v674 = vld [vmem:[%s1 + $0xd0] sm:$0xf]
      %v675 = vld [vmem:[%s1 + $0xd4] sm:$0xf]
      %v676 = vld [vmem:[%s1 + $0xd8] sm:$0xf]
      %v677 = vld [vmem:[%s1 + $0xdc] sm:$0xf]
      %v678 = vld [vmem:[%s1 + $0xe0] sm:$0xf]
      %v679 = vld [vmem:[%s1 + $0xe4] sm:$0xf]
      %v680 = vld [vmem:[%s1 + $0xe8] sm:$0xf]
      %v681 = vld [vmem:[%s1 + $0xec] sm:$0xf]
      %v682 = vld [vmem:[%s1 + $0xf0] sm:$0xf]
      %v683 = vld [vmem:[%s1 + $0xf4] sm:$0xf]
      %v684 = vld [vmem:[%s1 + $0xf8] sm:$0xf]
      %v685 = vld [vmem:[%s1 + $0xfc] sm:$0xf]
      %v686 = vld [vmem:[%s1 + $0x100] sm:$0xf]
      %v687 = vld [vmem:[%s1 + $0x104] sm:$0xf]
      %v688 = vld [vmem:[%s1 + $0x108] sm:$0xf]
      %v689 = vld [vmem:[%s1 + $0x10c] sm:$0xf]
      %v690 = vld [vmem:[%s1 + $0x110] sm:$0xf]
      %v691 = vld [vmem:[%s1 + $0x114] sm:$0xf]
      %v692 = vld [vmem:[%s1 + $0x118] sm:$0xf]
      %v693 = vld [vmem:[%s1 + $0x11c] sm:$0xf]
      %v694 = vld [vmem:[%s1 + $0x120] sm:$0xf]
      %v695 = vld [vmem:[%s1 + $0x124] sm:$0xf]
      %v696 = vld [vmem:[%s1 + $0x128] sm:$0xf]
      %v697 = vld [vmem:[%s1 + $0x12c] sm:$0xf]
      %v698 = vld [vmem:[%s1 + $0x130] sm:$0xf]
      %v699 = vld [vmem:[%s1 + $0x134] sm:$0xf]
      %v700 = vld [vmem:[%s1 + $0x138] sm:$0xf]
      %v701 = vld [vmem:[%s1 + $0x13c] sm:$0xf]
      %v702 = vld [vmem:[%s1 + $0x140] sm:$0xf]
      %v703 = vld [vmem:[%s1 + $0x144] sm:$0xf]
      %v704 = vld [vmem:[%s1 + $0x148] sm:$0xf]
      %v705 = vld [vmem:[%s1 + $0x14c] sm:$0xf]
      %v706 = vld [vmem:[%s1 + $0x150] sm:$0xf]
      %v707 = vld [vmem:[%s1 + $0x154] sm:$0xf]
      %v708 = vld [vmem:[%s1 + $0x158] sm:$0xf]
      %v709 = vld [vmem:[%s1 + $0x15c] sm:$0xf]
      %v710 = vld [vmem:[%s1 + $0x160] sm:$0xf]
      %v711 = vld [vmem:[%s1 + $0x164] sm:$0xf]
      %v712 = vld [vmem:[%s1 + $0x168] sm:$0xf]
      %v713 = vld [vmem:[%s1 + $0x16c] sm:$0xf]
      %v714 = vld [vmem:[%s1 + $0x170] sm:$0xf]
      %v715 = vld [vmem:[%s1 + $0x174] sm:$0xf]
      %v716 = vld [vmem:[%s1 + $0x178] sm:$0xf]
      %v717 = vld [vmem:[%s1 + $0x17c] sm:$0xf]
      %v718 = vld [vmem:[%s1 + $0x180] sm:$0xf]
      %v719 = vld [vmem:[%s1 + $0x184] sm:$0xf]
      %v720 = vld [vmem:[%s2] sm:$0x1]
      %v722 = vlaneseq
      %v723 = vshrl.u32 %v722, 7
      %v724 = vsub.s32 0, %v723
      %v725 = vrot.slane %v720, %v724
      %v825 = vunpack.c.l.b16 %v622
      %v826 = vunpack.c.l.b16 %v623
      %v827 = vunpack.c.l.b16 %v624
      %v828 = vunpack.c.l.b16 %v625
      %v829 = vunpack.c.l.b16 %v626
      %v830 = vunpack.c.l.b16 %v627
      %v831 = vunpack.c.l.b16 %v628
      %v832 = vunpack.c.l.b16 %v629
      %v833 = vunpack.c.l.b16 %v630
      %v834 = vunpack.c.l.b16 %v631
      %v835 = vunpack.c.l.b16 %v632
      %v836 = vunpack.c.l.b16 %v633
      %v837 = vunpack.c.l.b16 %v634
      %v838 = vunpack.c.l.b16 %v635
      %v839 = vunpack.c.l.b16 %v636
      %v840 = vunpack.c.l.b16 %v637
      %v841 = vunpack.c.l.b16 %v638
      %v842 = vunpack.c.l.b16 %v639
      %v843 = vunpack.c.l.b16 %v640
      %v844 = vunpack.c.l.b16 %v641
      %v845 = vunpack.c.l.b16 %v642
      %v846 = vunpack.c.l.b16 %v643
      %v847 = vunpack.c.l.b16 %v644
      %v848 = vunpack.c.l.b16 %v645
      %v849 = vunpack.c.l.b16 %v646
      %v850 = vunpack.c.l.b16 %v647
      %v851 = vunpack.c.l.b16 %v648
      %v852 = vunpack.c.l.b16 %v649
      %v853 = vunpack.c.l.b16 %v650
      %v854 = vunpack.c.l.b16 %v651
      %v855 = vunpack.c.l.b16 %v652
      %v856 = vunpack.c.l.b16 %v653
      %v857 = vunpack.c.l.b16 %v654
      %v858 = vunpack.c.l.b16 %v655
      %v859 = vunpack.c.l.b16 %v656
      %v860 = vunpack.c.l.b16 %v657
      %v861 = vunpack.c.l.b16 %v658
      %v862 = vunpack.c.l.b16 %v659
      %v863 = vunpack.c.l.b16 %v660
      %v864 = vunpack.c.l.b16 %v661
      %v865 = vunpack.c.l.b16 %v662
      %v866 = vunpack.c.l.b16 %v663
      %v867 = vunpack.c.l.b16 %v664
      %v868 = vunpack.c.l.b16 %v665
      %v869 = vunpack.c.l.b16 %v666
      %v870 = vunpack.c.l.b16 %v667
      %v871 = vunpack.c.l.b16 %v668
      %v872 = vunpack.c.l.b16 %v669
      %v873 = vunpack.c.l.b16 %v670
      %v874 = vunpack.c.l.b16 %v671
      %v875 = vunpack.c.l.b16 %v672
      %v876 = vunpack.c.l.b16 %v673
      %v877 = vunpack.c.l.b16 %v674
      %v878 = vunpack.c.l.b16 %v675
      %v879 = vunpack.c.l.b16 %v676
      %v880 = vunpack.c.l.b16 %v677
      %v881 = vunpack.c.l.b16 %v678
      %v882 = vunpack.c.l.b16 %v679
      %v883 = vunpack.c.l.b16 %v680
      %v884 = vunpack.c.l.b16 %v681
      %v885 = vunpack.c.l.b16 %v682
      %v886 = vunpack.c.l.b16 %v683
      %v887 = vunpack.c.l.b16 %v684
      %v888 = vunpack.c.l.b16 %v685
      %v889 = vunpack.c.l.b16 %v686
      %v890 = vunpack.c.l.b16 %v687
      %v891 = vunpack.c.l.b16 %v688
      %v892 = vunpack.c.l.b16 %v689
      %v893 = vunpack.c.l.b16 %v690
      %v894 = vunpack.c.l.b16 %v691
      %v895 = vunpack.c.l.b16 %v692
      %v896 = vunpack.c.l.b16 %v693
      %v897 = vunpack.c.l.b16 %v694
      %v898 = vunpack.c.l.b16 %v695
      %v899 = vunpack.c.l.b16 %v696
      %v900 = vunpack.c.l.b16 %v697
      %v901 = vunpack.c.l.b16 %v698
      %v902 = vunpack.c.l.b16 %v699
      %v903 = vunpack.c.l.b16 %v700
      %v904 = vunpack.c.l.b16 %v701
      %v905 = vunpack.c.l.b16 %v702
      %v906 = vunpack.c.l.b16 %v703
      %v907 = vunpack.c.l.b16 %v704
      %v908 = vunpack.c.l.b16 %v705
      %v909 = vunpack.c.l.b16 %v706
      %v910 = vunpack.c.l.b16 %v707
      %v911 = vunpack.c.l.b16 %v708
      %v912 = vunpack.c.l.b16 %v709
      %v913 = vunpack.c.l.b16 %v710
      %v914 = vunpack.c.l.b16 %v711
      %v915 = vunpack.c.l.b16 %v712
      %v916 = vunpack.c.l.b16 %v713
      %v917 = vunpack.c.l.b16 %v714
      %v918 = vunpack.c.l.b16 %v715
      %v919 = vunpack.c.l.b16 %v716
      %v920 = vunpack.c.l.b16 %v717
      %v921 = vunpack.c.l.b16 %v718
      %v922 = vunpack.c.l.b16 %v719
      %v923 = vpack.c.b16 %v826, %v825
      %v924 = vpack.c.b16 %v828, %v827
      %v925 = vpack.c.b16 %v830, %v829
      %v926 = vpack.c.b16 %v832, %v831
      %v927 = vpack.c.b16 %v834, %v833
      %v928 = vpack.c.b16 %v836, %v835
      %v929 = vpack.c.b16 %v838, %v837
      %v930 = vpack.c.b16 %v840, %v839
      %v931 = vpack.c.b16 %v842, %v841
      %v932 = vpack.c.b16 %v844, %v843
      %v933 = vpack.c.b16 %v846, %v845
      %v934 = vpack.c.b16 %v848, %v847
      %v935 = vpack.c.b16 %v850, %v849
      %v936 = vpack.c.b16 %v852, %v851
      %v937 = vpack.c.b16 %v854, %v853
      %v938 = vpack.c.b16 %v856, %v855
      %v939 = vpack.c.b16 %v858, %v857
      %v940 = vpack.c.b16 %v860, %v859
      %v941 = vpack.c.b16 %v862, %v861
      %v942 = vpack.c.b16 %v864, %v863
      %v943 = vpack.c.b16 %v866, %v865
      %v944 = vpack.c.b16 %v868, %v867
      %v945 = vpack.c.b16 %v870, %v869
      %v946 = vpack.c.b16 %v872, %v871
      %v947 = vpack.c.b16 %v874, %v873
      %v948 = vpack.c.b16 %v876, %v875
      %v949 = vpack.c.b16 %v878, %v877
      %v950 = vpack.c.b16 %v880, %v879
      %v951 = vpack.c.b16 %v882, %v881
      %v952 = vpack.c.b16 %v884, %v883
      %v953 = vpack.c.b16 %v886, %v885
      %v954 = vpack.c.b16 %v888, %v887
      %v955 = vpack.c.b16 %v890, %v889
      %v956 = vpack.c.b16 %v892, %v891
      %v957 = vpack.c.b16 %v894, %v893
      %v958 = vpack.c.b16 %v896, %v895
      %v959 = vpack.c.b16 %v898, %v897
      %v960 = vpack.c.b16 %v900, %v899
      %v961 = vpack.c.b16 %v902, %v901
      %v962 = vpack.c.b16 %v904, %v903
      %v963 = vpack.c.b16 %v906, %v905
      %v964 = vpack.c.b16 %v908, %v907
      %v965 = vpack.c.b16 %v910, %v909
      %v966 = vpack.c.b16 %v912, %v911
      %v967 = vpack.c.b16 %v914, %v913
      %v968 = vpack.c.b16 %v916, %v915
      %v969 = vpack.c.b16 %v918, %v917
      %v970 = vpack.c.b16 %v920, %v919
      %v971 = vpack.c.b16 %v922, %v921
      %vm1021 = vcmask 130048
      %v1023 = vsel %vm1021, %v516, 0
      %v1026 = vsel %vm1021, %v523, 0
      %v1029 = vsel %vm1021, %v530, 0
      %v1032 = vsel %vm1021, %v537, 0
      %v1035 = vsel %vm1021, %v544, 0
      %v1038 = vsel %vm1021, %v551, 0
      %v1041 = vsel %vm1021, %v558, 0
      %v1044 = vsel %vm1021, %v565, 0
      %v1047 = vsel %vm1021, %v572, 0
      %v1050 = vsel %vm1021, %v579, 0
      %v1053 = vsel %vm1021, %v586, 0
      %v1056 = vsel %vm1021, %v593, 0
      %v1059 = vsel %vm1021, %v600, 0
      %v1062 = vsel %vm1021, %v607, 0
      %v1065 = vsel %vm1021, %v614, 0
      %v1068 = vsel %vm1021, %v621, 0
      %1070 = vmatprep.subr.bf16.mxu0 0
      %1071 = vmatpush1.bf16.msra.mxu0 %v930
      %1072 = vmatprep.subr.bf16.mxu0 0
      %1073 = vmatpush1.bf16.msra.mxu0 %v929
      %1074 = vmatprep.subr.bf16.mxu0 0
      %1075 = vmatpush1.bf16.msra.mxu0 %v928
      %1076 = vmatprep.subr.bf16.mxu0 0
      %1077 = vmatpush1.bf16.msra.mxu0 %v927
      %1078 = vmatprep.subr.bf16.mxu0 0
      %1079 = vmatpush1.bf16.msra.mxu0 %v926
      %1080 = vmatprep.subr.bf16.mxu0 0
      %1081 = vmatpush1.bf16.msra.mxu0 %v925
      %1082 = vmatprep.subr.bf16.mxu0 0
      %1083 = vmatpush1.bf16.msra.mxu0 %v924
      %1084 = vmatprep.subr.bf16.mxu0 0
      %1085 = vmatpush1.bf16.msra.mxu0 %v923
      %1086 = vmatprep.subr.bf16.mxu0 0
      %1087 = vmatpush2.bf16.msra.mxu0 %v938
      %1088 = vmatprep.subr.bf16.mxu0 0
      %1089 = vmatpush2.bf16.msra.mxu0 %v937
      %1090 = vmatprep.subr.bf16.mxu0 0
      %1091 = vmatpush2.bf16.msra.mxu0 %v936
      %1092 = vmatprep.subr.bf16.mxu0 0
      %1093 = vmatpush2.bf16.msra.mxu0 %v935
      %1094 = vmatprep.subr.bf16.mxu0 0
      %1095 = vmatpush2.bf16.msra.mxu0 %v934
      %1096 = vmatprep.subr.bf16.mxu0 0
      %1097 = vmatpush2.bf16.msra.mxu0 %v933
      %1098 = vmatprep.subr.bf16.mxu0 0
      %1099 = vmatpush2.bf16.msra.mxu0 %v932
      %1100 = vmatprep.subr.bf16.mxu0 0
      %1101 = vmatpush2.bf16.msra.mxu0 %v931
      %1102 = vmatprep.mubr.bf16.mxu0 %v511
      %1103 = vmatmul.mubr.bf16.gmra.mxu0 %v510
      %v1104 = vpop.f32.mrf.mxu0
      %v1105 = vadd.f32 %v725, %v1104
      %v1106 = vpop.f32.mrf.mxu0
      %v1107 = vpop.f32.mrf.mxu0
      %v1108 = vadd.f32 %v725, %v1107
      %v1109 = vpop.f32.mrf.mxu0
      %1110 = vmatprep.mubr.bf16.mxu0 %v518
      %1111 = vmatmul.mubr.bf16.gmra.mxu0 %v517
      %v1112 = vpop.f32.mrf.mxu0
      %v1113 = vadd.f32 %v725, %v1112
      %v1114 = vpop.f32.mrf.mxu0
      %v1115 = vpop.f32.mrf.mxu0
      %v1116 = vadd.f32 %v725, %v1115
      %v1117 = vpop.f32.mrf.mxu0
      %1118 = vmatprep.mubr.bf16.mxu0 %v525
      %1119 = vmatmul.mubr.bf16.gmra.mxu0 %v524
      %v1120 = vpop.f32.mrf.mxu0
      %v1121 = vadd.f32 %v725, %v1120
      %v1122 = vpop.f32.mrf.mxu0
      %v1123 = vpop.f32.mrf.mxu0
      %v1124 = vadd.f32 %v725, %v1123
      %v1125 = vpop.f32.mrf.mxu0
      %1126 = vmatprep.mubr.bf16.mxu0 %v532
      %1127 = vmatmul.mubr.bf16.gmra.mxu0 %v531
      %v1128 = vpop.f32.mrf.mxu0
      %v1129 = vadd.f32 %v725, %v1128
      %v1130 = vpop.f32.mrf.mxu0
      %v1131 = vpop.f32.mrf.mxu0
      %v1132 = vadd.f32 %v725, %v1131
      %v1133 = vpop.f32.mrf.mxu0
      %1134 = vmatprep.mubr.bf16.mxu0 %v539
      %1135 = vmatmul.mubr.bf16.gmra.mxu0 %v538
      %v1136 = vpop.f32.mrf.mxu0
      %v1137 = vadd.f32 %v725, %v1136
      %v1138 = vpop.f32.mrf.mxu0
      %v1139 = vpop.f32.mrf.mxu0
      %v1140 = vadd.f32 %v725, %v1139
      %v1141 = vpop.f32.mrf.mxu0
      %1142 = vmatprep.mubr.bf16.mxu0 %v546
      %1143 = vmatmul.mubr.bf16.gmra.mxu0 %v545
      %v1144 = vpop.f32.mrf.mxu0
      %v1145 = vadd.f32 %v725, %v1144
      %v1146 = vpop.f32.mrf.mxu0
      %v1147 = vpop.f32.mrf.mxu0
      %v1148 = vadd.f32 %v725, %v1147
      %v1149 = vpop.f32.mrf.mxu0
      %1150 = vmatprep.mubr.bf16.mxu0 %v553
      %1151 = vmatmul.mubr.bf16.gmra.mxu0 %v552
      %v1152 = vpop.f32.mrf.mxu0
      %v1153 = vadd.f32 %v725, %v1152
      %v1154 = vpop.f32.mrf.mxu0
      %v1155 = vpop.f32.mrf.mxu0
      %v1156 = vadd.f32 %v725, %v1155
      %v1157 = vpop.f32.mrf.mxu0
      %1158 = vmatprep.mubr.bf16.mxu0 %v560
      %1159 = vmatmul.mubr.bf16.gmra.mxu0 %v559
      %v1160 = vpop.f32.mrf.mxu0
      %v1161 = vadd.f32 %v725, %v1160
      %v1162 = vpop.f32.mrf.mxu0
      %v1163 = vpop.f32.mrf.mxu0
      %v1164 = vadd.f32 %v725, %v1163
      %v1165 = vpop.f32.mrf.mxu0
      %1166 = vmatprep.mubr.bf16.mxu0 %v567
      %1167 = vmatmul.mubr.bf16.gmra.mxu0 %v566
      %v1168 = vpop.f32.mrf.mxu0
      %v1169 = vadd.f32 %v725, %v1168
      %v1170 = vpop.f32.mrf.mxu0
      %v1171 = vpop.f32.mrf.mxu0
      %v1172 = vadd.f32 %v725, %v1171
      %v1173 = vpop.f32.mrf.mxu0
      %1174 = vmatprep.mubr.bf16.mxu0 %v574
      %1175 = vmatmul.mubr.bf16.gmra.mxu0 %v573
      %v1176 = vpop.f32.mrf.mxu0
      %v1177 = vadd.f32 %v725, %v1176
      %v1178 = vpop.f32.mrf.mxu0
      %v1179 = vpop.f32.mrf.mxu0
      %v1180 = vadd.f32 %v725, %v1179
      %v1181 = vpop.f32.mrf.mxu0
      %1182 = vmatprep.mubr.bf16.mxu0 %v581
      %1183 = vmatmul.mubr.bf16.gmra.mxu0 %v580
      %v1184 = vpop.f32.mrf.mxu0
      %v1185 = vadd.f32 %v725, %v1184
      %v1186 = vpop.f32.mrf.mxu0
      %v1187 = vpop.f32.mrf.mxu0
      %v1188 = vadd.f32 %v725, %v1187
      %v1189 = vpop.f32.mrf.mxu0
      %1190 = vmatprep.mubr.bf16.mxu0 %v588
      %1191 = vmatmul.mubr.bf16.gmra.mxu0 %v587
      %v1192 = vpop.f32.mrf.mxu0
      %v1193 = vadd.f32 %v725, %v1192
      %v1194 = vpop.f32.mrf.mxu0
      %v1195 = vpop.f32.mrf.mxu0
      %v1196 = vadd.f32 %v725, %v1195
      %v1197 = vpop.f32.mrf.mxu0
      %1198 = vmatprep.mubr.bf16.mxu0 %v595
      %1199 = vmatmul.mubr.bf16.gmra.mxu0 %v594
      %v1200 = vpop.f32.mrf.mxu0
      %v1201 = vadd.f32 %v725, %v1200
      %v1202 = vpop.f32.mrf.mxu0
      %v1203 = vpop.f32.mrf.mxu0
      %v1204 = vadd.f32 %v725, %v1203
      %v1205 = vpop.f32.mrf.mxu0
      %1206 = vmatprep.mubr.bf16.mxu0 %v602
      %1207 = vmatmul.mubr.bf16.gmra.mxu0 %v601
      %v1208 = vpop.f32.mrf.mxu0
      %v1209 = vadd.f32 %v725, %v1208
      %v1210 = vpop.f32.mrf.mxu0
      %v1211 = vpop.f32.mrf.mxu0
      %v1212 = vadd.f32 %v725, %v1211
      %v1213 = vpop.f32.mrf.mxu0
      %1214 = vmatprep.mubr.bf16.mxu0 %v609
      %1215 = vmatmul.mubr.bf16.gmra.mxu0 %v608
      %v1216 = vpop.f32.mrf.mxu0
      %v1217 = vadd.f32 %v725, %v1216
      %v1218 = vpop.f32.mrf.mxu0
      %v1219 = vpop.f32.mrf.mxu0
      %v1220 = vadd.f32 %v725, %v1219
      %v1221 = vpop.f32.mrf.mxu0
      %1222 = vmatprep.mubr.bf16.mxu0 %v616
      %1223 = vmatmul.mubr.bf16.gmra.mxu0 %v615
      %v1224 = vpop.f32.mrf.mxu0
      %v1225 = vadd.f32 %v725, %v1224
      %v1226 = vpop.f32.mrf.mxu0
      %v1227 = vpop.f32.mrf.mxu0
      %v1228 = vadd.f32 %v725, %v1227
      %v1229 = vpop.f32.mrf.mxu0
      %1230 = vdwg.mxu0
      %1231 = vmatprep.subr.bf16.mxu0 0
      %1232 = vmatpush1.bf16.msra.mxu0 %v946
      %1233 = vmatprep.subr.bf16.mxu0 0
      %1234 = vmatpush1.bf16.msra.mxu0 %v945
      %1235 = vmatprep.subr.bf16.mxu0 0
      %1236 = vmatpush1.bf16.msra.mxu0 %v944
      %1237 = vmatprep.subr.bf16.mxu0 0
      %1238 = vmatpush1.bf16.msra.mxu0 %v943
      %1239 = vmatprep.subr.bf16.mxu0 0
      %1240 = vmatpush1.bf16.msra.mxu0 %v942
      %1241 = vmatprep.subr.bf16.mxu0 0
      %1242 = vmatpush1.bf16.msra.mxu0 %v941
      %1243 = vmatprep.subr.bf16.mxu0 0
      %1244 = vmatpush1.bf16.msra.mxu0 %v940
      %1245 = vmatprep.subr.bf16.mxu0 0
      %1246 = vmatpush1.bf16.msra.mxu0 %v939
      %1247 = vmatprep.subr.bf16.mxu0 0
      %1248 = vmatpush2.bf16.msra.mxu0 %v954
      %1249 = vmatprep.subr.bf16.mxu0 0
      %1250 = vmatpush2.bf16.msra.mxu0 %v953
      %1251 = vmatprep.subr.bf16.mxu0 0
      %1252 = vmatpush2.bf16.msra.mxu0 %v952
      %1253 = vmatprep.subr.bf16.mxu0 0
      %1254 = vmatpush2.bf16.msra.mxu0 %v951
      %1255 = vmatprep.subr.bf16.mxu0 0
      %1256 = vmatpush2.bf16.msra.mxu0 %v950
      %1257 = vmatprep.subr.bf16.mxu0 0
      %1258 = vmatpush2.bf16.msra.mxu0 %v949
      %1259 = vmatprep.subr.bf16.mxu0 0
      %1260 = vmatpush2.bf16.msra.mxu0 %v948
      %1261 = vmatprep.subr.bf16.mxu0 0
      %1262 = vmatpush2.bf16.msra.mxu0 %v947
      %1263 = vmatprep.mubr.bf16.mxu0 %v513
      %1264 = vmatmul.mubr.bf16.gmra.mxu0 %v512
      %v1265 = vpop.f32.mrf.mxu0
      %v1266 = vadd.f32 %v1105, %v1265
      %v1267 = vpop.f32.mrf.mxu0
      %v1268 = vpop.f32.mrf.mxu0
      %v1269 = vadd.f32 %v1108, %v1268
      %v1270 = vpop.f32.mrf.mxu0
      %1271 = vmatprep.mubr.bf16.mxu0 %v520
      %1272 = vmatmul.mubr.bf16.gmra.mxu0 %v519
      %v1273 = vpop.f32.mrf.mxu0
      %v1274 = vadd.f32 %v1113, %v1273
      %v1275 = vpop.f32.mrf.mxu0
      %v1276 = vpop.f32.mrf.mxu0
      %v1277 = vadd.f32 %v1116, %v1276
      %v1278 = vpop.f32.mrf.mxu0
      %1279 = vmatprep.mubr.bf16.mxu0 %v527
      %1280 = vmatmul.mubr.bf16.gmra.mxu0 %v526
      %v1281 = vpop.f32.mrf.mxu0
      %v1282 = vadd.f32 %v1121, %v1281
      %v1283 = vpop.f32.mrf.mxu0
      %v1284 = vpop.f32.mrf.mxu0
      %v1285 = vadd.f32 %v1124, %v1284
      %v1286 = vpop.f32.mrf.mxu0
      %1287 = vmatprep.mubr.bf16.mxu0 %v534
      %1288 = vmatmul.mubr.bf16.gmra.mxu0 %v533
      %v1289 = vpop.f32.mrf.mxu0
      %v1290 = vadd.f32 %v1129, %v1289
      %v1291 = vpop.f32.mrf.mxu0
      %v1292 = vpop.f32.mrf.mxu0
      %v1293 = vadd.f32 %v1132, %v1292
      %v1294 = vpop.f32.mrf.mxu0
      %1295 = vmatprep.mubr.bf16.mxu0 %v541
      %1296 = vmatmul.mubr.bf16.gmra.mxu0 %v540
      %v1297 = vpop.f32.mrf.mxu0
      %v1298 = vadd.f32 %v1137, %v1297
      %v1299 = vpop.f32.mrf.mxu0
      %v1300 = vpop.f32.mrf.mxu0
      %v1301 = vadd.f32 %v1140, %v1300
      %v1302 = vpop.f32.mrf.mxu0
      %1303 = vmatprep.mubr.bf16.mxu0 %v548
      %1304 = vmatmul.mubr.bf16.gmra.mxu0 %v547
      %v1305 = vpop.f32.mrf.mxu0
      %v1306 = vadd.f32 %v1145, %v1305
      %v1307 = vpop.f32.mrf.mxu0
      %v1308 = vpop.f32.mrf.mxu0
      %v1309 = vadd.f32 %v1148, %v1308
      %v1310 = vpop.f32.mrf.mxu0
      %1311 = vmatprep.mubr.bf16.mxu0 %v555
      %1312 = vmatmul.mubr.bf16.gmra.mxu0 %v554
      %v1313 = vpop.f32.mrf.mxu0
      %v1314 = vadd.f32 %v1153, %v1313
      %v1315 = vpop.f32.mrf.mxu0
      %v1316 = vpop.f32.mrf.mxu0
      %v1317 = vadd.f32 %v1156, %v1316
      %v1318 = vpop.f32.mrf.mxu0
      %1319 = vmatprep.mubr.bf16.mxu0 %v562
      %1320 = vmatmul.mubr.bf16.gmra.mxu0 %v561
      %v1321 = vpop.f32.mrf.mxu0
      %v1322 = vadd.f32 %v1161, %v1321
      %v1323 = vpop.f32.mrf.mxu0
      %v1324 = vpop.f32.mrf.mxu0
      %v1325 = vadd.f32 %v1164, %v1324
      %v1326 = vpop.f32.mrf.mxu0
      %1327 = vmatprep.mubr.bf16.mxu0 %v569
      %1328 = vmatmul.mubr.bf16.gmra.mxu0 %v568
      %v1329 = vpop.f32.mrf.mxu0
      %v1330 = vadd.f32 %v1169, %v1329
      %v1331 = vpop.f32.mrf.mxu0
      %v1332 = vpop.f32.mrf.mxu0
      %v1333 = vadd.f32 %v1172, %v1332
      %v1334 = vpop.f32.mrf.mxu0
      %1335 = vmatprep.mubr.bf16.mxu0 %v576
      %1336 = vmatmul.mubr.bf16.gmra.mxu0 %v575
      %v1337 = vpop.f32.mrf.mxu0
      %v1338 = vadd.f32 %v1177, %v1337
      %v1339 = vpop.f32.mrf.mxu0
      %v1340 = vpop.f32.mrf.mxu0
      %v1341 = vadd.f32 %v1180, %v1340
      %v1342 = vpop.f32.mrf.mxu0
      %1343 = vmatprep.mubr.bf16.mxu0 %v583
      %1344 = vmatmul.mubr.bf16.gmra.mxu0 %v582
      %v1345 = vpop.f32.mrf.mxu0
      %v1346 = vadd.f32 %v1185, %v1345
      %v1347 = vpop.f32.mrf.mxu0
      %v1348 = vpop.f32.mrf.mxu0
      %v1349 = vadd.f32 %v1188, %v1348
      %v1350 = vpop.f32.mrf.mxu0
      %1351 = vmatprep.mubr.bf16.mxu0 %v590
      %1352 = vmatmul.mubr.bf16.gmra.mxu0 %v589
      %v1353 = vpop.f32.mrf.mxu0
      %v1354 = vadd.f32 %v1193, %v1353
      %v1355 = vpop.f32.mrf.mxu0
      %v1356 = vpop.f32.mrf.mxu0
      %v1357 = vadd.f32 %v1196, %v1356
      %v1358 = vpop.f32.mrf.mxu0
      %1359 = vmatprep.mubr.bf16.mxu0 %v597
      %1360 = vmatmul.mubr.bf16.gmra.mxu0 %v596
      %v1361 = vpop.f32.mrf.mxu0
      %v1362 = vadd.f32 %v1201, %v1361
      %v1363 = vpop.f32.mrf.mxu0
      %v1364 = vpop.f32.mrf.mxu0
      %v1365 = vadd.f32 %v1204, %v1364
      %v1366 = vpop.f32.mrf.mxu0
      %1367 = vmatprep.mubr.bf16.mxu0 %v604
      %1368 = vmatmul.mubr.bf16.gmra.mxu0 %v603
      %v1369 = vpop.f32.mrf.mxu0
      %v1370 = vadd.f32 %v1209, %v1369
      %v1371 = vpop.f32.mrf.mxu0
      %v1372 = vpop.f32.mrf.mxu0
      %v1373 = vadd.f32 %v1212, %v1372
      %v1374 = vpop.f32.mrf.mxu0
      %1375 = vmatprep.mubr.bf16.mxu0 %v611
      %1376 = vmatmul.mubr.bf16.gmra.mxu0 %v610
      %v1377 = vpop.f32.mrf.mxu0
      %v1378 = vadd.f32 %v1217, %v1377
      %v1379 = vpop.f32.mrf.mxu0
      %v1380 = vpop.f32.mrf.mxu0
      %v1381 = vadd.f32 %v1220, %v1380
      %v1382 = vpop.f32.mrf.mxu0
      %1383 = vmatprep.mubr.bf16.mxu0 %v618
      %1384 = vmatmul.mubr.bf16.gmra.mxu0 %v617
      %v1385 = vpop.f32.mrf.mxu0
      %v1386 = vadd.f32 %v1225, %v1385
      %v1387 = vpop.f32.mrf.mxu0
      %v1388 = vpop.f32.mrf.mxu0
      %v1389 = vadd.f32 %v1228, %v1388
      %v1390 = vpop.f32.mrf.mxu0
      %1391 = vdwg.mxu0
      %1392 = vmatprep.subr.bf16.mxu0 0
      %1393 = vmatpush1.bf16.msra.mxu0 %v962
      %1394 = vmatprep.subr.bf16.mxu0 0
      %1395 = vmatpush1.bf16.msra.mxu0 %v961
      %1396 = vmatprep.subr.bf16.mxu0 0
      %1397 = vmatpush1.bf16.msra.mxu0 %v960
      %1398 = vmatprep.subr.bf16.mxu0 0
      %1399 = vmatpush1.bf16.msra.mxu0 %v959
      %1400 = vmatprep.subr.bf16.mxu0 0
      %1401 = vmatpush1.bf16.msra.mxu0 %v958
      %1402 = vmatprep.subr.bf16.mxu0 0
      %1403 = vmatpush1.bf16.msra.mxu0 %v957
      %1404 = vmatprep.subr.bf16.mxu0 0
      %1405 = vmatpush1.bf16.msra.mxu0 %v956
      %1406 = vmatprep.subr.bf16.mxu0 0
      %1407 = vmatpush1.bf16.msra.mxu0 %v955
      %1408 = vmatprep.subr.bf16.mxu0 0
      %1409 = vmatpush2.bf16.msra.mxu0 %v970
      %1410 = vmatprep.subr.bf16.mxu0 0
      %1411 = vmatpush2.bf16.msra.mxu0 %v969
      %1412 = vmatprep.subr.bf16.mxu0 0
      %1413 = vmatpush2.bf16.msra.mxu0 %v968
      %1414 = vmatprep.subr.bf16.mxu0 0
      %1415 = vmatpush2.bf16.msra.mxu0 %v967
      %1416 = vmatprep.subr.bf16.mxu0 0
      %1417 = vmatpush2.bf16.msra.mxu0 %v966
      %1418 = vmatprep.subr.bf16.mxu0 0
      %1419 = vmatpush2.bf16.msra.mxu0 %v965
      %1420 = vmatprep.subr.bf16.mxu0 0
      %1421 = vmatpush2.bf16.msra.mxu0 %v964
      %1422 = vmatprep.subr.bf16.mxu0 0
      %1423 = vmatpush2.bf16.msra.mxu0 %v963
      %1424 = vmatprep.mubr.bf16.mxu0 %v515
      %1425 = vmatmul.mubr.bf16.gmra.mxu0 %v514
      %v1426 = vpop.f32.mrf.mxu0
      %v1427 = vadd.f32 %v1266, %v1426
      %v1428 = vpop.f32.mrf.mxu0
      %v1429 = vpop.f32.mrf.mxu0
      %v1430 = vadd.f32 %v1269, %v1429
      %v1431 = vpop.f32.mrf.mxu0
      %1432 = vmatprep.mubr.bf16.mxu0 %v522
      %1433 = vmatmul.mubr.bf16.gmra.mxu0 %v521
      %v1434 = vpop.f32.mrf.mxu0
      %v1435 = vadd.f32 %v1274, %v1434
      %v1436 = vpop.f32.mrf.mxu0
      %v1437 = vpop.f32.mrf.mxu0
      %v1438 = vadd.f32 %v1277, %v1437
      %v1439 = vpop.f32.mrf.mxu0
      %1440 = vmatprep.mubr.bf16.mxu0 %v529
      %1441 = vmatmul.mubr.bf16.gmra.mxu0 %v528
      %v1442 = vpop.f32.mrf.mxu0
      %v1443 = vadd.f32 %v1282, %v1442
      %v1444 = vpop.f32.mrf.mxu0
      %v1445 = vpop.f32.mrf.mxu0
      %v1446 = vadd.f32 %v1285, %v1445
      %v1447 = vpop.f32.mrf.mxu0
      %1448 = vmatprep.mubr.bf16.mxu0 %v536
      %1449 = vmatmul.mubr.bf16.gmra.mxu0 %v535
      %v1450 = vpop.f32.mrf.mxu0
      %v1451 = vadd.f32 %v1290, %v1450
      %v1452 = vpop.f32.mrf.mxu0
      %v1453 = vpop.f32.mrf.mxu0
      %v1454 = vadd.f32 %v1293, %v1453
      %v1455 = vpop.f32.mrf.mxu0
      %1456 = vmatprep.mubr.bf16.mxu0 %v543
      %1457 = vmatmul.mubr.bf16.gmra.mxu0 %v542
      %v1458 = vpop.f32.mrf.mxu0
      %v1459 = vadd.f32 %v1298, %v1458
      %v1460 = vpop.f32.mrf.mxu0
      %v1461 = vpop.f32.mrf.mxu0
      %v1462 = vadd.f32 %v1301, %v1461
      %v1463 = vpop.f32.mrf.mxu0
      %1464 = vmatprep.mubr.bf16.mxu0 %v550
      %1465 = vmatmul.mubr.bf16.gmra.mxu0 %v549
      %v1466 = vpop.f32.mrf.mxu0
      %v1467 = vadd.f32 %v1306, %v1466
      %v1468 = vpop.f32.mrf.mxu0
      %v1469 = vpop.f32.mrf.mxu0
      %v1470 = vadd.f32 %v1309, %v1469
      %v1471 = vpop.f32.mrf.mxu0
      %1472 = vmatprep.mubr.bf16.mxu0 %v557
      %1473 = vmatmul.mubr.bf16.gmra.mxu0 %v556
      %v1474 = vpop.f32.mrf.mxu0
      %v1475 = vadd.f32 %v1314, %v1474
      %v1476 = vpop.f32.mrf.mxu0
      %v1477 = vpop.f32.mrf.mxu0
      %v1478 = vadd.f32 %v1317, %v1477
      %v1479 = vpop.f32.mrf.mxu0
      %1480 = vmatprep.mubr.bf16.mxu0 %v564
      %1481 = vmatmul.mubr.bf16.gmra.mxu0 %v563
      %v1482 = vpop.f32.mrf.mxu0
      %v1483 = vadd.f32 %v1322, %v1482
      %v1484 = vpop.f32.mrf.mxu0
      %v1485 = vpop.f32.mrf.mxu0
      %v1486 = vadd.f32 %v1325, %v1485
      %v1487 = vpop.f32.mrf.mxu0
      %1488 = vmatprep.mubr.bf16.mxu0 %v571
      %1489 = vmatmul.mubr.bf16.gmra.mxu0 %v570
      %v1490 = vpop.f32.mrf.mxu0
      %v1491 = vadd.f32 %v1330, %v1490
      %v1492 = vpop.f32.mrf.mxu0
      %v1493 = vpop.f32.mrf.mxu0
      %v1494 = vadd.f32 %v1333, %v1493
      %v1495 = vpop.f32.mrf.mxu0
      %1496 = vmatprep.mubr.bf16.mxu0 %v578
      %1497 = vmatmul.mubr.bf16.gmra.mxu0 %v577
      %v1498 = vpop.f32.mrf.mxu0
      %v1499 = vadd.f32 %v1338, %v1498
      %v1500 = vpop.f32.mrf.mxu0
      %v1501 = vpop.f32.mrf.mxu0
      %v1502 = vadd.f32 %v1341, %v1501
      %v1503 = vpop.f32.mrf.mxu0
      %1504 = vmatprep.mubr.bf16.mxu0 %v585
      %1505 = vmatmul.mubr.bf16.gmra.mxu0 %v584
      %v1506 = vpop.f32.mrf.mxu0
      %v1507 = vadd.f32 %v1346, %v1506
      %v1508 = vpop.f32.mrf.mxu0
      %v1509 = vpop.f32.mrf.mxu0
      %v1510 = vadd.f32 %v1349, %v1509
      %v1511 = vpop.f32.mrf.mxu0
      %1512 = vmatprep.mubr.bf16.mxu0 %v592
      %1513 = vmatmul.mubr.bf16.gmra.mxu0 %v591
      %v1514 = vpop.f32.mrf.mxu0
      %v1515 = vadd.f32 %v1354, %v1514
      %v1516 = vpop.f32.mrf.mxu0
      %v1517 = vpop.f32.mrf.mxu0
      %v1518 = vadd.f32 %v1357, %v1517
      %v1519 = vpop.f32.mrf.mxu0
      %1520 = vmatprep.mubr.bf16.mxu0 %v599
      %1521 = vmatmul.mubr.bf16.gmra.mxu0 %v598
      %v1522 = vpop.f32.mrf.mxu0
      %v1523 = vadd.f32 %v1362, %v1522
      %v1524 = vpop.f32.mrf.mxu0
      %v1525 = vpop.f32.mrf.mxu0
      %v1526 = vadd.f32 %v1365, %v1525
      %v1527 = vpop.f32.mrf.mxu0
      %1528 = vmatprep.mubr.bf16.mxu0 %v606
      %1529 = vmatmul.mubr.bf16.gmra.mxu0 %v605
      %v1530 = vpop.f32.mrf.mxu0
      %v1531 = vadd.f32 %v1370, %v1530
      %v1532 = vpop.f32.mrf.mxu0
      %v1533 = vpop.f32.mrf.mxu0
      %v1534 = vadd.f32 %v1373, %v1533
      %v1535 = vpop.f32.mrf.mxu0
      %1536 = vmatprep.mubr.bf16.mxu0 %v613
      %1537 = vmatmul.mubr.bf16.gmra.mxu0 %v612
      %v1538 = vpop.f32.mrf.mxu0
      %v1539 = vadd.f32 %v1378, %v1538
      %v1540 = vpop.f32.mrf.mxu0
      %v1541 = vpop.f32.mrf.mxu0
      %v1542 = vadd.f32 %v1381, %v1541
      %v1543 = vpop.f32.mrf.mxu0
      %1544 = vmatprep.mubr.bf16.mxu0 %v620
      %1545 = vmatmul.mubr.bf16.gmra.mxu0 %v619
      %v1546 = vpop.f32.mrf.mxu0
      %v1547 = vadd.f32 %v1386, %v1546
      %v1548 = vpop.f32.mrf.mxu0
      %v1549 = vpop.f32.mrf.mxu0
      %v1550 = vadd.f32 %v1389, %v1549
      %v1551 = vpop.f32.mrf.mxu0
      %1552 = vdwg.mxu0
      %1553 = vmatprep.subr.bf16.mxu0 0
      %1554 = vmatpush1.bf16.msra.mxu0 0
      %1555 = vmatprep.subr.bf16.mxu0 0
      %1556 = vmatpush1.bf16.msra.mxu0 0
      %1557 = vmatprep.subr.bf16.mxu0 0
      %1558 = vmatpush1.bf16.msra.mxu0 0
      %1559 = vmatprep.subr.bf16.mxu0 0
      %1560 = vmatpush1.bf16.msra.mxu0 0
      %1561 = vmatprep.subr.bf16.mxu0 0
      %1562 = vmatpush1.bf16.msra.mxu0 0
      %1563 = vmatprep.subr.bf16.mxu0 0
      %1564 = vmatpush1.bf16.msra.mxu0 0
      %1565 = vmatprep.subr.bf16.mxu0 0
      %1566 = vmatpush1.bf16.msra.mxu0 0
      %1567 = vmatprep.subr.bf16.mxu0 0
      %1568 = vmatpush1.bf16.msra.mxu0 %v971
      %1569 = vmatprep.subr.bf16.mxu0 0
      %1570 = vmatpush2.bf16.msra.mxu0 0
      %1571 = vmatprep.subr.bf16.mxu0 0
      %1572 = vmatpush2.bf16.msra.mxu0 0
      %1573 = vmatprep.subr.bf16.mxu0 0
      %1574 = vmatpush2.bf16.msra.mxu0 0
      %1575 = vmatprep.subr.bf16.mxu0 0
      %1576 = vmatpush2.bf16.msra.mxu0 0
      %1577 = vmatprep.subr.bf16.mxu0 0
      %1578 = vmatpush2.bf16.msra.mxu0 0
      %1579 = vmatprep.subr.bf16.mxu0 0
      %1580 = vmatpush2.bf16.msra.mxu0 0
      %1581 = vmatprep.subr.bf16.mxu0 0
      %1582 = vmatpush2.bf16.msra.mxu0 0
      %1583 = vmatprep.subr.bf16.mxu0 0
      %1584 = vmatpush2.bf16.msra.mxu0 0
      %1585 = vmatprep.mubr.bf16.mxu0 0
      %1586 = vmatmul.mubr.bf16.gmra.mxu0 %v1023
      %v1587 = vpop.f32.mrf.mxu0
      %v1588 = vadd.f32 %v1427, %v1587
      %v1589 = vpop.f32.mrf.mxu0
      %v1590 = vpop.f32.mrf.mxu0
      %v1591 = vadd.f32 %v1430, %v1590
      %v1592 = vpop.f32.mrf.mxu0
      %1593 = vmatprep.mubr.bf16.mxu0 0
      %1594 = vmatmul.mubr.bf16.gmra.mxu0 %v1026
      %v1595 = vpop.f32.mrf.mxu0
      %v1596 = vadd.f32 %v1435, %v1595
      %v1597 = vpop.f32.mrf.mxu0
      %v1598 = vpop.f32.mrf.mxu0
      %v1599 = vadd.f32 %v1438, %v1598
      %v1600 = vpop.f32.mrf.mxu0
      %1601 = vmatprep.mubr.bf16.mxu0 0
      %1602 = vmatmul.mubr.bf16.gmra.mxu0 %v1029
      %v1603 = vpop.f32.mrf.mxu0
      %v1604 = vadd.f32 %v1443, %v1603
      %v1605 = vpop.f32.mrf.mxu0
      %v1606 = vpop.f32.mrf.mxu0
      %v1607 = vadd.f32 %v1446, %v1606
      %v1608 = vpop.f32.mrf.mxu0
      %1609 = vmatprep.mubr.bf16.mxu0 0
      %1610 = vmatmul.mubr.bf16.gmra.mxu0 %v1032
      %v1611 = vpop.f32.mrf.mxu0
      %v1612 = vadd.f32 %v1451, %v1611
      %v1613 = vpop.f32.mrf.mxu0
      %v1614 = vpop.f32.mrf.mxu0
      %v1615 = vadd.f32 %v1454, %v1614
      %v1616 = vpop.f32.mrf.mxu0
      %1617 = vmatprep.mubr.bf16.mxu0 0
      %1618 = vmatmul.mubr.bf16.gmra.mxu0 %v1035
      %v1619 = vpop.f32.mrf.mxu0
      %v1620 = vadd.f32 %v1459, %v1619
      %v1621 = vpop.f32.mrf.mxu0
      %v1622 = vpop.f32.mrf.mxu0
      %v1623 = vadd.f32 %v1462, %v1622
      %v1624 = vpop.f32.mrf.mxu0
      %1625 = vmatprep.mubr.bf16.mxu0 0
      %1626 = vmatmul.mubr.bf16.gmra.mxu0 %v1038
      %v1627 = vpop.f32.mrf.mxu0
      %v1628 = vadd.f32 %v1467, %v1627
      %v1629 = vpop.f32.mrf.mxu0
      %v1630 = vpop.f32.mrf.mxu0
      %v1631 = vadd.f32 %v1470, %v1630
      %v1632 = vpop.f32.mrf.mxu0
      %1633 = vmatprep.mubr.bf16.mxu0 0
      %1634 = vmatmul.mubr.bf16.gmra.mxu0 %v1041
      %v1635 = vpop.f32.mrf.mxu0
      %v1636 = vadd.f32 %v1475, %v1635
      %v1637 = vpop.f32.mrf.mxu0
      %v1638 = vpop.f32.mrf.mxu0
      %v1639 = vadd.f32 %v1478, %v1638
      %v1640 = vpop.f32.mrf.mxu0
      %1641 = vmatprep.mubr.bf16.mxu0 0
      %1642 = vmatmul.mubr.bf16.gmra.mxu0 %v1044
      %v1643 = vpop.f32.mrf.mxu0
      %v1644 = vadd.f32 %v1483, %v1643
      %v1645 = vpop.f32.mrf.mxu0
      %v1646 = vpop.f32.mrf.mxu0
      %v1647 = vadd.f32 %v1486, %v1646
      %v1648 = vpop.f32.mrf.mxu0
      %1649 = vmatprep.mubr.bf16.mxu0 0
      %1650 = vmatmul.mubr.bf16.gmra.mxu0 %v1047
      %v1651 = vpop.f32.mrf.mxu0
      %v1652 = vadd.f32 %v1491, %v1651
      %v1653 = vpop.f32.mrf.mxu0
      %v1654 = vpop.f32.mrf.mxu0
      %v1655 = vadd.f32 %v1494, %v1654
      %v1656 = vpop.f32.mrf.mxu0
      %1657 = vmatprep.mubr.bf16.mxu0 0
      %1658 = vmatmul.mubr.bf16.gmra.mxu0 %v1050
      %v1659 = vpop.f32.mrf.mxu0
      %v1660 = vadd.f32 %v1499, %v1659
      %v1661 = vpop.f32.mrf.mxu0
      %v1662 = vpop.f32.mrf.mxu0
      %v1663 = vadd.f32 %v1502, %v1662
      %v1664 = vpop.f32.mrf.mxu0
      %1665 = vmatprep.mubr.bf16.mxu0 0
      %1666 = vmatmul.mubr.bf16.gmra.mxu0 %v1053
      %v1667 = vpop.f32.mrf.mxu0
      %v1668 = vadd.f32 %v1507, %v1667
      %v1669 = vpop.f32.mrf.mxu0
      %v1670 = vpop.f32.mrf.mxu0
      %v1671 = vadd.f32 %v1510, %v1670
      %v1672 = vpop.f32.mrf.mxu0
      %1673 = vmatprep.mubr.bf16.mxu0 0
      %1674 = vmatmul.mubr.bf16.gmra.mxu0 %v1056
      %v1675 = vpop.f32.mrf.mxu0
      %v1676 = vadd.f32 %v1515, %v1675
      %v1677 = vpop.f32.mrf.mxu0
      %v1678 = vpop.f32.mrf.mxu0
      %v1679 = vadd.f32 %v1518, %v1678
      %v1680 = vpop.f32.mrf.mxu0
      %1681 = vmatprep.mubr.bf16.mxu0 0
      %1682 = vmatmul.mubr.bf16.gmra.mxu0 %v1059
      %v1683 = vpop.f32.mrf.mxu0
      %v1684 = vadd.f32 %v1523, %v1683
      %v1685 = vpop.f32.mrf.mxu0
      %v1686 = vpop.f32.mrf.mxu0
      %v1687 = vadd.f32 %v1526, %v1686
      %v1688 = vpop.f32.mrf.mxu0
      %1689 = vmatprep.mubr.bf16.mxu0 0
      %1690 = vmatmul.mubr.bf16.gmra.mxu0 %v1062
      %v1691 = vpop.f32.mrf.mxu0
      %v1692 = vadd.f32 %v1531, %v1691
      %v1693 = vpop.f32.mrf.mxu0
      %v1694 = vpop.f32.mrf.mxu0
      %v1695 = vadd.f32 %v1534, %v1694
      %v1696 = vpop.f32.mrf.mxu0
      %1697 = vmatprep.mubr.bf16.mxu0 0
      %1698 = vmatmul.mubr.bf16.gmra.mxu0 %v1065
      %v1699 = vpop.f32.mrf.mxu0
      %v1700 = vadd.f32 %v1539, %v1699
      %v1701 = vpop.f32.mrf.mxu0
      %v1702 = vpop.f32.mrf.mxu0
      %v1703 = vadd.f32 %v1542, %v1702
      %v1704 = vpop.f32.mrf.mxu0
      %1705 = vmatprep.mubr.bf16.mxu0 0
      %1706 = vmatmul.mubr.bf16.gmra.mxu0 %v1068
      %v1707 = vpop.f32.mrf.mxu0
      %v1708 = vadd.f32 %v1547, %v1707
      %v1709 = vpop.f32.mrf.mxu0
      %v1710 = vpop.f32.mrf.mxu0
      %v1711 = vadd.f32 %v1550, %v1710
      %v1712 = vpop.f32.mrf.mxu0
      %1713 = vdwg.mxu0
      %v1714 = vmax.f32 %v1588, 0.0
      %v1715 = vmax.f32 %v1591, 0.0
      %v1716 = vmax.f32 %v1596, 0.0
      %v1717 = vmax.f32 %v1599, 0.0
      %v1718 = vmax.f32 %v1604, 0.0
      %v1719 = vmax.f32 %v1607, 0.0
      %v1720 = vmax.f32 %v1612, 0.0
      %v1721 = vmax.f32 %v1615, 0.0
      %v1722 = vmax.f32 %v1620, 0.0
      %v1723 = vmax.f32 %v1623, 0.0
      %v1724 = vmax.f32 %v1628, 0.0
      %v1725 = vmax.f32 %v1631, 0.0
      %v1726 = vmax.f32 %v1636, 0.0
      %v1727 = vmax.f32 %v1639, 0.0
      %v1728 = vmax.f32 %v1644, 0.0
      %v1729 = vmax.f32 %v1647, 0.0
      %v1730 = vmax.f32 %v1652, 0.0
      %v1731 = vmax.f32 %v1655, 0.0
      %v1732 = vmax.f32 %v1660, 0.0
      %v1733 = vmax.f32 %v1663, 0.0
      %v1734 = vmax.f32 %v1668, 0.0
      %v1735 = vmax.f32 %v1671, 0.0
      %v1736 = vmax.f32 %v1676, 0.0
      %v1737 = vmax.f32 %v1679, 0.0
      %v1738 = vmax.f32 %v1684, 0.0
      %v1739 = vmax.f32 %v1687, 0.0
      %v1740 = vmax.f32 %v1692, 0.0
      %v1741 = vmax.f32 %v1695, 0.0
      %v1742 = vmax.f32 %v1700, 0.0
      %v1743 = vmax.f32 %v1703, 0.0
      %v1744 = vmax.f32 %v1708, 0.0
      %v1745 = vmax.f32 %v1711, 0.0
      %v1746 = vpack.c.bf16 %v1715, %v1714
      %v1747 = vpack.c.bf16 %v1717, %v1716
      %v1748 = vpack.c.bf16 %v1719, %v1718
      %v1749 = vpack.c.bf16 %v1721, %v1720
      %v1750 = vpack.c.bf16 %v1723, %v1722
      %v1751 = vpack.c.bf16 %v1725, %v1724
      %v1752 = vpack.c.bf16 %v1727, %v1726
      %v1753 = vpack.c.bf16 %v1729, %v1728
      %v1754 = vpack.c.bf16 %v1731, %v1730
      %v1755 = vpack.c.bf16 %v1733, %v1732
      %v1756 = vpack.c.bf16 %v1735, %v1734
      %v1757 = vpack.c.bf16 %v1737, %v1736
      %v1758 = vpack.c.bf16 %v1739, %v1738
      %v1759 = vpack.c.bf16 %v1741, %v1740
      %v1760 = vpack.c.bf16 %v1743, %v1742
      %v1761 = vpack.c.bf16 %v1745, %v1744
      %v1762 = vld [vmem:[%s3] sm:$0xf]
      %v1763 = vld [vmem:[%s3 + $0x4] sm:$0xf]
      %v1764 = vld [vmem:[%s3 + $0x8] sm:$0xf]
      %v1765 = vld [vmem:[%s3 + $0xc] sm:$0xf]
      %v1766 = vld [vmem:[%s4] sm:$0x1]
      %v1768 = vlaneseq
      %v1769 = vshrl.u32 %v1768, 7
      %v1770 = vsub.s32 0, %v1769
      %v1771 = vrot.slane %v1766, %v1770
      %v1777 = vunpack.c.l.b16 %v1762
      %v1778 = vunpack.c.l.b16 %v1763
      %v1779 = vunpack.c.l.b16 %v1764
      %v1780 = vunpack.c.l.b16 %v1765
      %v1781 = vpack.c.b16 %v1778, %v1777
      %v1782 = vpack.c.b16 %v1780, %v1779
      %vm1785 = vcmask 261120
      %v1787 = vsel %vm1785, %v1746, 0
      %v1790 = vsel %vm1785, %v1747, 0
      %v1793 = vsel %vm1785, %v1748, 0
      %v1796 = vsel %vm1785, %v1749, 0
      %v1799 = vsel %vm1785, %v1750, 0
      %v1802 = vsel %vm1785, %v1751, 0
      %v1805 = vsel %vm1785, %v1752, 0
      %v1808 = vsel %vm1785, %v1753, 0
      %v1811 = vsel %vm1785, %v1754, 0
      %v1814 = vsel %vm1785, %v1755, 0
      %v1817 = vsel %vm1785, %v1756, 0
      %v1820 = vsel %vm1785, %v1757, 0
      %v1823 = vsel %vm1785, %v1758, 0
      %v1826 = vsel %vm1785, %v1759, 0
      %v1829 = vsel %vm1785, %v1760, 0
      %v1832 = vsel %vm1785, %v1761, 0
      %1834 = vmatprep.subr.bf16.mxu0 0
      %1835 = vmatpush1.bf16.msra.mxu0 0
      %1836 = vmatprep.subr.bf16.mxu0 0
      %1837 = vmatpush1.bf16.msra.mxu0 0
      %1838 = vmatprep.subr.bf16.mxu0 0
      %1839 = vmatpush1.bf16.msra.mxu0 0
      %1840 = vmatprep.subr.bf16.mxu0 0
      %1841 = vmatpush1.bf16.msra.mxu0 0
      %1842 = vmatprep.subr.bf16.mxu0 0
      %1843 = vmatpush1.bf16.msra.mxu0 0
      %1844 = vmatprep.subr.bf16.mxu0 0
      %1845 = vmatpush1.bf16.msra.mxu0 0
      %1846 = vmatprep.subr.bf16.mxu0 0
      %1847 = vmatpush1.bf16.msra.mxu0 %v1782
      %1848 = vmatprep.subr.bf16.mxu0 0
      %1849 = vmatpush1.bf16.msra.mxu0 %v1781
      %1850 = vmatprep.subr.bf16.mxu0 0
      %1851 = vmatpush2.bf16.msra.mxu0 0
      %1852 = vmatprep.subr.bf16.mxu0 0
      %1853 = vmatpush2.bf16.msra.mxu0 0
      %1854 = vmatprep.subr.bf16.mxu0 0
      %1855 = vmatpush2.bf16.msra.mxu0 0
      %1856 = vmatprep.subr.bf16.mxu0 0
      %1857 = vmatpush2.bf16.msra.mxu0 0
      %1858 = vmatprep.subr.bf16.mxu0 0
      %1859 = vmatpush2.bf16.msra.mxu0 0
      %1860 = vmatprep.subr.bf16.mxu0 0
      %1861 = vmatpush2.bf16.msra.mxu0 0
      %1862 = vmatprep.subr.bf16.mxu0 0
      %1863 = vmatpush2.bf16.msra.mxu0 0
      %1864 = vmatprep.subr.bf16.mxu0 0
      %1865 = vmatpush2.bf16.msra.mxu0 0
      %1866 = vmatprep.mubr.bf16.mxu0 0
      %1867 = vmatmul.mubr.bf16.gmra.mxu0 %v1787
      %v1868 = vpop.f32.mrf.mxu0
      %v1869 = vadd.f32 %v1771, %v1868
      %v1870 = vpop.f32.mrf.mxu0
      %v1871 = vpop.f32.mrf.mxu0
      %v1872 = vadd.f32 %v1771, %v1871
      %v1873 = vpop.f32.mrf.mxu0
      %1874 = vmatprep.mubr.bf16.mxu0 0
      %1875 = vmatmul.mubr.bf16.gmra.mxu0 %v1790
      %v1876 = vpop.f32.mrf.mxu0
      %v1877 = vadd.f32 %v1771, %v1876
      %v1878 = vpop.f32.mrf.mxu0
      %v1879 = vpop.f32.mrf.mxu0
      %v1880 = vadd.f32 %v1771, %v1879
      %v1881 = vpop.f32.mrf.mxu0
      %1882 = vmatprep.mubr.bf16.mxu0 0
      %1883 = vmatmul.mubr.bf16.gmra.mxu0 %v1793
      %v1884 = vpop.f32.mrf.mxu0
      %v1885 = vadd.f32 %v1771, %v1884
      %v1886 = vpop.f32.mrf.mxu0
      %v1887 = vpop.f32.mrf.mxu0
      %v1888 = vadd.f32 %v1771, %v1887
      %v1889 = vpop.f32.mrf.mxu0
      %1890 = vmatprep.mubr.bf16.mxu0 0
      %1891 = vmatmul.mubr.bf16.gmra.mxu0 %v1796
      %v1892 = vpop.f32.mrf.mxu0
      %v1893 = vadd.f32 %v1771, %v1892
      %v1894 = vpop.f32.mrf.mxu0
      %v1895 = vpop.f32.mrf.mxu0
      %v1896 = vadd.f32 %v1771, %v1895
      %v1897 = vpop.f32.mrf.mxu0
      %1898 = vmatprep.mubr.bf16.mxu0 0
      %1899 = vmatmul.mubr.bf16.gmra.mxu0 %v1799
      %v1900 = vpop.f32.mrf.mxu0
      %v1901 = vadd.f32 %v1771, %v1900
      %v1902 = vpop.f32.mrf.mxu0
      %v1903 = vpop.f32.mrf.mxu0
      %v1904 = vadd.f32 %v1771, %v1903
      %v1905 = vpop.f32.mrf.mxu0
      %1906 = vmatprep.mubr.bf16.mxu0 0
      %1907 = vmatmul.mubr.bf16.gmra.mxu0 %v1802
      %v1908 = vpop.f32.mrf.mxu0
      %v1909 = vadd.f32 %v1771, %v1908
      %v1910 = vpop.f32.mrf.mxu0
      %v1911 = vpop.f32.mrf.mxu0
      %v1912 = vadd.f32 %v1771, %v1911
      %v1913 = vpop.f32.mrf.mxu0
      %1914 = vmatprep.mubr.bf16.mxu0 0
      %1915 = vmatmul.mubr.bf16.gmra.mxu0 %v1805
      %v1916 = vpop.f32.mrf.mxu0
      %v1917 = vadd.f32 %v1771, %v1916
      %v1918 = vpop.f32.mrf.mxu0
      %v1919 = vpop.f32.mrf.mxu0
      %v1920 = vadd.f32 %v1771, %v1919
      %v1921 = vpop.f32.mrf.mxu0
      %1922 = vmatprep.mubr.bf16.mxu0 0
      %1923 = vmatmul.mubr.bf16.gmra.mxu0 %v1808
      %v1924 = vpop.f32.mrf.mxu0
      %v1925 = vadd.f32 %v1771, %v1924
      %v1926 = vpop.f32.mrf.mxu0
      %v1927 = vpop.f32.mrf.mxu0
      %v1928 = vadd.f32 %v1771, %v1927
      %v1929 = vpop.f32.mrf.mxu0
      %1930 = vmatprep.mubr.bf16.mxu0 0
      %1931 = vmatmul.mubr.bf16.gmra.mxu0 %v1811
      %v1932 = vpop.f32.mrf.mxu0
      %v1933 = vadd.f32 %v1771, %v1932
      %v1934 = vpop.f32.mrf.mxu0
      %v1935 = vpop.f32.mrf.mxu0
      %v1936 = vadd.f32 %v1771, %v1935
      %v1937 = vpop.f32.mrf.mxu0
      %1938 = vmatprep.mubr.bf16.mxu0 0
      %1939 = vmatmul.mubr.bf16.gmra.mxu0 %v1814
      %v1940 = vpop.f32.mrf.mxu0
      %v1941 = vadd.f32 %v1771, %v1940
      %v1942 = vpop.f32.mrf.mxu0
      %v1943 = vpop.f32.mrf.mxu0
      %v1944 = vadd.f32 %v1771, %v1943
      %v1945 = vpop.f32.mrf.mxu0
      %1946 = vmatprep.mubr.bf16.mxu0 0
      %1947 = vmatmul.mubr.bf16.gmra.mxu0 %v1817
      %v1948 = vpop.f32.mrf.mxu0
      %v1949 = vadd.f32 %v1771, %v1948
      %v1950 = vpop.f32.mrf.mxu0
      %v1951 = vpop.f32.mrf.mxu0
      %v1952 = vadd.f32 %v1771, %v1951
      %v1953 = vpop.f32.mrf.mxu0
      %1954 = vmatprep.mubr.bf16.mxu0 0
      %1955 = vmatmul.mubr.bf16.gmra.mxu0 %v1820
      %v1956 = vpop.f32.mrf.mxu0
      %v1957 = vadd.f32 %v1771, %v1956
      %v1958 = vpop.f32.mrf.mxu0
      %v1959 = vpop.f32.mrf.mxu0
      %v1960 = vadd.f32 %v1771, %v1959
      %v1961 = vpop.f32.mrf.mxu0
      %1962 = vmatprep.mubr.bf16.mxu0 0
      %1963 = vmatmul.mubr.bf16.gmra.mxu0 %v1823
      %v1964 = vpop.f32.mrf.mxu0
      %v1965 = vadd.f32 %v1771, %v1964
      %v1966 = vpop.f32.mrf.mxu0
      %v1967 = vpop.f32.mrf.mxu0
      %v1968 = vadd.f32 %v1771, %v1967
      %v1969 = vpop.f32.mrf.mxu0
      %1970 = vmatprep.mubr.bf16.mxu0 0
      %1971 = vmatmul.mubr.bf16.gmra.mxu0 %v1826
      %v1972 = vpop.f32.mrf.mxu0
      %v1973 = vadd.f32 %v1771, %v1972
      %v1974 = vpop.f32.mrf.mxu0
      %v1975 = vpop.f32.mrf.mxu0
      %v1976 = vadd.f32 %v1771, %v1975
      %v1977 = vpop.f32.mrf.mxu0
      %1978 = vmatprep.mubr.bf16.mxu0 0
      %1979 = vmatmul.mubr.bf16.gmra.mxu0 %v1829
      %v1980 = vpop.f32.mrf.mxu0
      %v1981 = vadd.f32 %v1771, %v1980
      %v1982 = vpop.f32.mrf.mxu0
      %v1983 = vpop.f32.mrf.mxu0
      %v1984 = vadd.f32 %v1771, %v1983
      %v1985 = vpop.f32.mrf.mxu0
      %1986 = vmatprep.mubr.bf16.mxu0 0
      %1987 = vmatmul.mubr.bf16.gmra.mxu0 %v1832
      %v1988 = vpop.f32.mrf.mxu0
      %v1989 = vadd.f32 %v1771, %v1988
      %v1990 = vpop.f32.mrf.mxu0
      %v1991 = vpop.f32.mrf.mxu0
      %v1992 = vadd.f32 %v1771, %v1991
      %v1993 = vpop.f32.mrf.mxu0
      %1994 = vdwg.mxu0
      %v1995 = vmax.f32 %v1869, 0.0
      %v1996 = vmax.f32 %v1872, 0.0
      %v1997 = vmax.f32 %v1877, 0.0
      %v1998 = vmax.f32 %v1880, 0.0
      %v1999 = vmax.f32 %v1885, 0.0
      %v2000 = vmax.f32 %v1888, 0.0
      %v2001 = vmax.f32 %v1893, 0.0
      %v2002 = vmax.f32 %v1896, 0.0
      %v2003 = vmax.f32 %v1901, 0.0
      %v2004 = vmax.f32 %v1904, 0.0
      %v2005 = vmax.f32 %v1909, 0.0
      %v2006 = vmax.f32 %v1912, 0.0
      %v2007 = vmax.f32 %v1917, 0.0
      %v2008 = vmax.f32 %v1920, 0.0
      %v2009 = vmax.f32 %v1925, 0.0
      %v2010 = vmax.f32 %v1928, 0.0
      %v2011 = vmax.f32 %v1933, 0.0
      %v2012 = vmax.f32 %v1936, 0.0
      %v2013 = vmax.f32 %v1941, 0.0
      %v2014 = vmax.f32 %v1944, 0.0
      %v2015 = vmax.f32 %v1949, 0.0
      %v2016 = vmax.f32 %v1952, 0.0
      %v2017 = vmax.f32 %v1957, 0.0
      %v2018 = vmax.f32 %v1960, 0.0
      %v2019 = vmax.f32 %v1965, 0.0
      %v2020 = vmax.f32 %v1968, 0.0
      %v2021 = vmax.f32 %v1973, 0.0
      %v2022 = vmax.f32 %v1976, 0.0
      %v2023 = vmax.f32 %v1981, 0.0
      %v2024 = vmax.f32 %v1984, 0.0
      %v2025 = vmax.f32 %v1989, 0.0
      %v2026 = vmax.f32 %v1992, 0.0
      %v2027 = vpack.c.bf16 %v1996, %v1995
      %v2028 = vpack.c.bf16 %v1998, %v1997
      %v2029 = vpack.c.bf16 %v2000, %v1999
      %v2030 = vpack.c.bf16 %v2002, %v2001
      %v2031 = vpack.c.bf16 %v2004, %v2003
      %v2032 = vpack.c.bf16 %v2006, %v2005
      %v2033 = vpack.c.bf16 %v2008, %v2007
      %v2034 = vpack.c.bf16 %v2010, %v2009
      %v2035 = vpack.c.bf16 %v2012, %v2011
      %v2036 = vpack.c.bf16 %v2014, %v2013
      %v2037 = vpack.c.bf16 %v2016, %v2015
      %v2038 = vpack.c.bf16 %v2018, %v2017
      %v2039 = vpack.c.bf16 %v2020, %v2019
      %v2040 = vpack.c.bf16 %v2022, %v2021
      %v2041 = vpack.c.bf16 %v2024, %v2023
      %v2042 = vpack.c.bf16 %v2026, %v2025
      %v2043 = vld [vmem:[%s5] sm:$0xf]
      %v2044 = vld [vmem:[%s5 + $0x4] sm:$0xf]
      %v2045 = vld [vmem:[%s5 + $0x8] sm:$0xf]
      %v2046 = vld [vmem:[%s5 + $0xc] sm:$0xf]
      %v2047 = vld [vmem:[%s6] sm:$0x1]
      %v2049 = vlaneseq
      %v2050 = vshrl.u32 %v2049, 7
      %v2051 = vsub.s32 0, %v2050
      %v2052 = vrot.slane %v2047, %v2051
      %v2058 = vunpack.c.l.b16 %v2043
      %v2059 = vunpack.c.l.b16 %v2044
      %v2060 = vunpack.c.l.b16 %v2045
      %v2061 = vunpack.c.l.b16 %v2046
      %v2062 = vpack.c.b16 %v2059, %v2058
      %v2063 = vpack.c.b16 %v2061, %v2060
      %v2067 = vsel %vm1785, %v2027, 0
      %v2070 = vsel %vm1785, %v2028, 0
      %v2073 = vsel %vm1785, %v2029, 0
      %v2076 = vsel %vm1785, %v2030, 0
      %v2079 = vsel %vm1785, %v2031, 0
      %v2082 = vsel %vm1785, %v2032, 0
      %v2085 = vsel %vm1785, %v2033, 0
      %v2088 = vsel %vm1785, %v2034, 0
      %v2091 = vsel %vm1785, %v2035, 0
      %v2094 = vsel %vm1785, %v2036, 0
      %v2097 = vsel %vm1785, %v2037, 0
      %v2100 = vsel %vm1785, %v2038, 0
      %v2103 = vsel %vm1785, %v2039, 0
      %v2106 = vsel %vm1785, %v2040, 0
      %v2109 = vsel %vm1785, %v2041, 0
      %v2112 = vsel %vm1785, %v2042, 0
      %2114 = vmatprep.subr.bf16.mxu0 0
      %2115 = vmatpush1.bf16.msra.mxu0 0
      %2116 = vmatprep.subr.bf16.mxu0 0
      %2117 = vmatpush1.bf16.msra.mxu0 0
      %2118 = vmatprep.subr.bf16.mxu0 0
      %2119 = vmatpush1.bf16.msra.mxu0 0
      %2120 = vmatprep.subr.bf16.mxu0 0
      %2121 = vmatpush1.bf16.msra.mxu0 0
      %2122 = vmatprep.subr.bf16.mxu0 0
      %2123 = vmatpush1.bf16.msra.mxu0 0
      %2124 = vmatprep.subr.bf16.mxu0 0
      %2125 = vmatpush1.bf16.msra.mxu0 0
      %2126 = vmatprep.subr.bf16.mxu0 0
      %2127 = vmatpush1.bf16.msra.mxu0 %v2063
      %2128 = vmatprep.subr.bf16.mxu0 0
      %2129 = vmatpush1.bf16.msra.mxu0 %v2062
      %2130 = vmatprep.subr.bf16.mxu0 0
      %2131 = vmatpush2.bf16.msra.mxu0 0
      %2132 = vmatprep.subr.bf16.mxu0 0
      %2133 = vmatpush2.bf16.msra.mxu0 0
      %2134 = vmatprep.subr.bf16.mxu0 0
      %2135 = vmatpush2.bf16.msra.mxu0 0
      %2136 = vmatprep.subr.bf16.mxu0 0
      %2137 = vmatpush2.bf16.msra.mxu0 0
      %2138 = vmatprep.subr.bf16.mxu0 0
      %2139 = vmatpush2.bf16.msra.mxu0 0
      %2140 = vmatprep.subr.bf16.mxu0 0
      %2141 = vmatpush2.bf16.msra.mxu0 0
      %2142 = vmatprep.subr.bf16.mxu0 0
      %2143 = vmatpush2.bf16.msra.mxu0 0
      %2144 = vmatprep.subr.bf16.mxu0 0
      %2145 = vmatpush2.bf16.msra.mxu0 0
      %2146 = vmatprep.mubr.bf16.mxu0 0
      %2147 = vmatmul.mubr.bf16.gmra.mxu0 %v2067
      %v2148 = vpop.f32.mrf.mxu0
      %v2149 = vadd.f32 %v2052, %v2148
      %v2150 = vpop.f32.mrf.mxu0
      %v2151 = vpop.f32.mrf.mxu0
      %v2152 = vadd.f32 %v2052, %v2151
      %v2153 = vpop.f32.mrf.mxu0
      %2154 = vmatprep.mubr.bf16.mxu0 0
      %2155 = vmatmul.mubr.bf16.gmra.mxu0 %v2070
      %v2156 = vpop.f32.mrf.mxu0
      %v2157 = vadd.f32 %v2052, %v2156
      %v2158 = vpop.f32.mrf.mxu0
      %v2159 = vpop.f32.mrf.mxu0
      %v2160 = vadd.f32 %v2052, %v2159
      %v2161 = vpop.f32.mrf.mxu0
      %2162 = vmatprep.mubr.bf16.mxu0 0
      %2163 = vmatmul.mubr.bf16.gmra.mxu0 %v2073
      %v2164 = vpop.f32.mrf.mxu0
      %v2165 = vadd.f32 %v2052, %v2164
      %v2166 = vpop.f32.mrf.mxu0
      %v2167 = vpop.f32.mrf.mxu0
      %v2168 = vadd.f32 %v2052, %v2167
      %v2169 = vpop.f32.mrf.mxu0
      %2170 = vmatprep.mubr.bf16.mxu0 0
      %2171 = vmatmul.mubr.bf16.gmra.mxu0 %v2076
      %v2172 = vpop.f32.mrf.mxu0
      %v2173 = vadd.f32 %v2052, %v2172
      %v2174 = vpop.f32.mrf.mxu0
      %v2175 = vpop.f32.mrf.mxu0
      %v2176 = vadd.f32 %v2052, %v2175
      %v2177 = vpop.f32.mrf.mxu0
      %2178 = vmatprep.mubr.bf16.mxu0 0
      %2179 = vmatmul.mubr.bf16.gmra.mxu0 %v2079
      %v2180 = vpop.f32.mrf.mxu0
      %v2181 = vadd.f32 %v2052, %v2180
      %v2182 = vpop.f32.mrf.mxu0
      %v2183 = vpop.f32.mrf.mxu0
      %v2184 = vadd.f32 %v2052, %v2183
      %v2185 = vpop.f32.mrf.mxu0
      %2186 = vmatprep.mubr.bf16.mxu0 0
      %2187 = vmatmul.mubr.bf16.gmra.mxu0 %v2082
      %v2188 = vpop.f32.mrf.mxu0
      %v2189 = vadd.f32 %v2052, %v2188
      %v2190 = vpop.f32.mrf.mxu0
      %v2191 = vpop.f32.mrf.mxu0
      %v2192 = vadd.f32 %v2052, %v2191
      %v2193 = vpop.f32.mrf.mxu0
      %2194 = vmatprep.mubr.bf16.mxu0 0
      %2195 = vmatmul.mubr.bf16.gmra.mxu0 %v2085
      %v2196 = vpop.f32.mrf.mxu0
      %v2197 = vadd.f32 %v2052, %v2196
      %v2198 = vpop.f32.mrf.mxu0
      %v2199 = vpop.f32.mrf.mxu0
      %v2200 = vadd.f32 %v2052, %v2199
      %v2201 = vpop.f32.mrf.mxu0
      %2202 = vmatprep.mubr.bf16.mxu0 0
      %2203 = vmatmul.mubr.bf16.gmra.mxu0 %v2088
      %v2204 = vpop.f32.mrf.mxu0
      %v2205 = vadd.f32 %v2052, %v2204
      %v2206 = vpop.f32.mrf.mxu0
      %v2207 = vpop.f32.mrf.mxu0
      %v2208 = vadd.f32 %v2052, %v2207
      %v2209 = vpop.f32.mrf.mxu0
      %2210 = vmatprep.mubr.bf16.mxu0 0
      %2211 = vmatmul.mubr.bf16.gmra.mxu0 %v2091
      %v2212 = vpop.f32.mrf.mxu0
      %v2213 = vadd.f32 %v2052, %v2212
      %v2214 = vpop.f32.mrf.mxu0
      %v2215 = vpop.f32.mrf.mxu0
      %v2216 = vadd.f32 %v2052, %v2215
      %v2217 = vpop.f32.mrf.mxu0
      %2218 = vmatprep.mubr.bf16.mxu0 0
      %2219 = vmatmul.mubr.bf16.gmra.mxu0 %v2094
      %v2220 = vpop.f32.mrf.mxu0
      %v2221 = vadd.f32 %v2052, %v2220
      %v2222 = vpop.f32.mrf.mxu0
      %v2223 = vpop.f32.mrf.mxu0
      %v2224 = vadd.f32 %v2052, %v2223
      %v2225 = vpop.f32.mrf.mxu0
      %2226 = vmatprep.mubr.bf16.mxu0 0
      %2227 = vmatmul.mubr.bf16.gmra.mxu0 %v2097
      %v2228 = vpop.f32.mrf.mxu0
      %v2229 = vadd.f32 %v2052, %v2228
      %v2230 = vpop.f32.mrf.mxu0
      %v2231 = vpop.f32.mrf.mxu0
      %v2232 = vadd.f32 %v2052, %v2231
      %v2233 = vpop.f32.mrf.mxu0
      %2234 = vmatprep.mubr.bf16.mxu0 0
      %2235 = vmatmul.mubr.bf16.gmra.mxu0 %v2100
      %v2236 = vpop.f32.mrf.mxu0
      %v2237 = vadd.f32 %v2052, %v2236
      %v2238 = vpop.f32.mrf.mxu0
      %v2239 = vpop.f32.mrf.mxu0
      %v2240 = vadd.f32 %v2052, %v2239
      %v2241 = vpop.f32.mrf.mxu0
      %2242 = vmatprep.mubr.bf16.mxu0 0
      %2243 = vmatmul.mubr.bf16.gmra.mxu0 %v2103
      %v2244 = vpop.f32.mrf.mxu0
      %v2245 = vadd.f32 %v2052, %v2244
      %v2246 = vpop.f32.mrf.mxu0
      %v2247 = vpop.f32.mrf.mxu0
      %v2248 = vadd.f32 %v2052, %v2247
      %v2249 = vpop.f32.mrf.mxu0
      %2250 = vmatprep.mubr.bf16.mxu0 0
      %2251 = vmatmul.mubr.bf16.gmra.mxu0 %v2106
      %v2252 = vpop.f32.mrf.mxu0
      %v2253 = vadd.f32 %v2052, %v2252
      %v2254 = vpop.f32.mrf.mxu0
      %v2255 = vpop.f32.mrf.mxu0
      %v2256 = vadd.f32 %v2052, %v2255
      %v2257 = vpop.f32.mrf.mxu0
      %2258 = vmatprep.mubr.bf16.mxu0 0
      %2259 = vmatmul.mubr.bf16.gmra.mxu0 %v2109
      %v2260 = vpop.f32.mrf.mxu0
      %v2261 = vadd.f32 %v2052, %v2260
      %v2262 = vpop.f32.mrf.mxu0
      %v2263 = vpop.f32.mrf.mxu0
      %v2264 = vadd.f32 %v2052, %v2263
      %v2265 = vpop.f32.mrf.mxu0
      %2266 = vmatprep.mubr.bf16.mxu0 0
      %2267 = vmatmul.mubr.bf16.gmra.mxu0 %v2112
      %v2268 = vpop.f32.mrf.mxu0
      %v2269 = vadd.f32 %v2052, %v2268
      %v2270 = vpop.f32.mrf.mxu0
      %v2271 = vpop.f32.mrf.mxu0
      %v2272 = vadd.f32 %v2052, %v2271
      %v2273 = vpop.f32.mrf.mxu0
      %2274 = vdwg.mxu0
      %v2275 = vmul.f32 %v2149, 1.442695
      %v2276 = vpow.pop %v2275
      %v2277 = vmul.f32 %v2152, 1.442695
      %v2278 = vpow.pop %v2277
      %v2279 = vmul.f32 %v2157, 1.442695
      %v2280 = vpow.pop %v2279
      %v2281 = vmul.f32 %v2160, 1.442695
      %v2282 = vpow.pop %v2281
      %v2283 = vmul.f32 %v2165, 1.442695
      %v2284 = vpow.pop %v2283
      %v2285 = vmul.f32 %v2168, 1.442695
      %v2286 = vpow.pop %v2285
      %v2287 = vmul.f32 %v2173, 1.442695
      %v2288 = vpow.pop %v2287
      %v2289 = vmul.f32 %v2176, 1.442695
      %v2290 = vpow.pop %v2289
      %v2291 = vmul.f32 %v2181, 1.442695
      %v2292 = vpow.pop %v2291
      %v2293 = vmul.f32 %v2184, 1.442695
      %v2294 = vpow.pop %v2293
      %v2295 = vmul.f32 %v2189, 1.442695
      %v2296 = vpow.pop %v2295
      %v2297 = vmul.f32 %v2192, 1.442695
      %v2298 = vpow.pop %v2297
      %v2299 = vmul.f32 %v2197, 1.442695
      %v2300 = vpow.pop %v2299
      %v2301 = vmul.f32 %v2200, 1.442695
      %v2302 = vpow.pop %v2301
      %v2303 = vmul.f32 %v2205, 1.442695
      %v2304 = vpow.pop %v2303
      %v2305 = vmul.f32 %v2208, 1.442695
      %v2306 = vpow.pop %v2305
      %v2307 = vmul.f32 %v2213, 1.442695
      %v2308 = vpow.pop %v2307
      %v2309 = vmul.f32 %v2216, 1.442695
      %v2310 = vpow.pop %v2309
      %v2311 = vmul.f32 %v2221, 1.442695
      %v2312 = vpow.pop %v2311
      %v2313 = vmul.f32 %v2224, 1.442695
      %v2314 = vpow.pop %v2313
      %v2315 = vmul.f32 %v2229, 1.442695
      %v2316 = vpow.pop %v2315
      %v2317 = vmul.f32 %v2232, 1.442695
      %v2318 = vpow.pop %v2317
      %v2319 = vmul.f32 %v2237, 1.442695
      %v2320 = vpow.pop %v2319
      %v2321 = vmul.f32 %v2240, 1.442695
      %v2322 = vpow.pop %v2321
      %v2323 = vmul.f32 %v2245, 1.442695
      %v2324 = vpow.pop %v2323
      %v2325 = vmul.f32 %v2248, 1.442695
      %v2326 = vpow.pop %v2325
      %v2327 = vmul.f32 %v2253, 1.442695
      %v2328 = vpow.pop %v2327
      %v2329 = vmul.f32 %v2256, 1.442695
      %v2330 = vpow.pop %v2329
      %v2331 = vmul.f32 %v2261, 1.442695
      %v2332 = vpow.pop %v2331
      %v2333 = vmul.f32 %v2264, 1.442695
      %v2334 = vpow.pop %v2333
      %v2335 = vmul.f32 %v2269, 1.442695
      %v2336 = vpow.pop %v2335
      %v2337 = vmul.f32 %v2272, 1.442695
      %v2338 = vpow.pop %v2337
      %vm2339 = vcmask 80896
      %v2340 = vsel %vm2339, %v2276, 0.0
      %2341 = vadd.xlane.f32.xlu0 %v2340
      %v2342 = vpop.xlane.xlu0 %2341
      %v2343 = vsel %vm2339, %v2278, 0.0
      %2344 = vadd.xlane.f32.xlu0 %v2343
      %v2345 = vpop.xlane.xlu0 %2344
      %v2346 = vsel %vm2339, %v2280, 0.0
      %2347 = vadd.xlane.f32.xlu0 %v2346
      %v2348 = vpop.xlane.xlu0 %2347
      %v2349 = vsel %vm2339, %v2282, 0.0
      %2350 = vadd.xlane.f32.xlu0 %v2349
      %v2351 = vpop.xlane.xlu0 %2350
      %v2352 = vsel %vm2339, %v2284, 0.0
      %2353 = vadd.xlane.f32.xlu0 %v2352
      %v2354 = vpop.xlane.xlu0 %2353
      %v2355 = vsel %vm2339, %v2286, 0.0
      %2356 = vadd.xlane.f32.xlu0 %v2355
      %v2357 = vpop.xlane.xlu0 %2356
      %v2358 = vsel %vm2339, %v2288, 0.0
      %2359 = vadd.xlane.f32.xlu0 %v2358
      %v2360 = vpop.xlane.xlu0 %2359
      %v2361 = vsel %vm2339, %v2290, 0.0
      %2362 = vadd.xlane.f32.xlu0 %v2361
      %v2363 = vpop.xlane.xlu0 %2362
      %v2364 = vsel %vm2339, %v2292, 0.0
      %2365 = vadd.xlane.f32.xlu0 %v2364
      %v2366 = vpop.xlane.xlu0 %2365
      %v2367 = vsel %vm2339, %v2294, 0.0
      %2368 = vadd.xlane.f32.xlu0 %v2367
      %v2369 = vpop.xlane.xlu0 %2368
      %v2370 = vsel %vm2339, %v2296, 0.0
      %2371 = vadd.xlane.f32.xlu0 %v2370
      %v2372 = vpop.xlane.xlu0 %2371
      %v2373 = vsel %vm2339, %v2298, 0.0
      %2374 = vadd.xlane.f32.xlu0 %v2373
      %v2375 = vpop.xlane.xlu0 %2374
      %v2376 = vsel %vm2339, %v2300, 0.0
      %2377 = vadd.xlane.f32.xlu0 %v2376
      %v2378 = vpop.xlane.xlu0 %2377
      %v2379 = vsel %vm2339, %v2302, 0.0
      %2380 = vadd.xlane.f32.xlu0 %v2379
      %v2381 = vpop.xlane.xlu0 %2380
      %v2382 = vsel %vm2339, %v2304, 0.0
      %2383 = vadd.xlane.f32.xlu0 %v2382
      %v2384 = vpop.xlane.xlu0 %2383
      %v2385 = vsel %vm2339, %v2306, 0.0
      %2386 = vadd.xlane.f32.xlu0 %v2385
      %v2387 = vpop.xlane.xlu0 %2386
      %v2388 = vsel %vm2339, %v2308, 0.0
      %2389 = vadd.xlane.f32.xlu0 %v2388
      %v2390 = vpop.xlane.xlu0 %2389
      %v2391 = vsel %vm2339, %v2310, 0.0
      %2392 = vadd.xlane.f32.xlu0 %v2391
      %v2393 = vpop.xlane.xlu0 %2392
      %v2394 = vsel %vm2339, %v2312, 0.0
      %2395 = vadd.xlane.f32.xlu0 %v2394
      %v2396 = vpop.xlane.xlu0 %2395
      %v2397 = vsel %vm2339, %v2314, 0.0
      %2398 = vadd.xlane.f32.xlu0 %v2397
      %v2399 = vpop.xlane.xlu0 %2398
      %v2400 = vsel %vm2339, %v2316, 0.0
      %2401 = vadd.xlane.f32.xlu0 %v2400
      %v2402 = vpop.xlane.xlu0 %2401
      %v2403 = vsel %vm2339, %v2318, 0.0
      %2404 = vadd.xlane.f32.xlu0 %v2403
      %v2405 = vpop.xlane.xlu0 %2404
      %v2406 = vsel %vm2339, %v2320, 0.0
      %2407 = vadd.xlane.f32.xlu0 %v2406
      %v2408 = vpop.xlane.xlu0 %2407
      %v2409 = vsel %vm2339, %v2322, 0.0
      %2410 = vadd.xlane.f32.xlu0 %v2409
      %v2411 = vpop.xlane.xlu0 %2410
      %v2412 = vsel %vm2339, %v2324, 0.0
      %2413 = vadd.xlane.f32.xlu0 %v2412
      %v2414 = vpop.xlane.xlu0 %2413
      %v2415 = vsel %vm2339, %v2326, 0.0
      %2416 = vadd.xlane.f32.xlu0 %v2415
      %v2417 = vpop.xlane.xlu0 %2416
      %v2418 = vsel %vm2339, %v2328, 0.0
      %2419 = vadd.xlane.f32.xlu0 %v2418
      %v2420 = vpop.xlane.xlu0 %2419
      %v2421 = vsel %vm2339, %v2330, 0.0
      %2422 = vadd.xlane.f32.xlu0 %v2421
      %v2423 = vpop.xlane.xlu0 %2422
      %v2424 = vsel %vm2339, %v2332, 0.0
      %2425 = vadd.xlane.f32.xlu0 %v2424
      %v2426 = vpop.xlane.xlu0 %2425
      %v2427 = vsel %vm2339, %v2334, 0.0
      %2428 = vadd.xlane.f32.xlu0 %v2427
      %v2429 = vpop.xlane.xlu0 %2428
      %v2430 = vsel %vm2339, %v2336, 0.0
      %2431 = vadd.xlane.f32.xlu0 %v2430
      %v2432 = vpop.xlane.xlu0 %2431
      %v2433 = vsel %vm2339, %v2338, 0.0
      %2434 = vadd.xlane.f32.xlu0 %v2433
      %v2435 = vpop.xlane.xlu0 %2434
      %v2436 = vlog2.pop %v2342
      %v2437 = vmul.f32 %v2436, 0.6931472
      %v2438 = vlog2.pop %v2345
      %v2439 = vmul.f32 %v2438, 0.6931472
      %v2440 = vlog2.pop %v2348
      %v2441 = vmul.f32 %v2440, 0.6931472
      %v2442 = vlog2.pop %v2351
      %v2443 = vmul.f32 %v2442, 0.6931472
      %v2444 = vlog2.pop %v2354
      %v2445 = vmul.f32 %v2444, 0.6931472
      %v2446 = vlog2.pop %v2357
      %v2447 = vmul.f32 %v2446, 0.6931472
      %v2448 = vlog2.pop %v2360
      %v2449 = vmul.f32 %v2448, 0.6931472
      %v2450 = vlog2.pop %v2363
      %v2451 = vmul.f32 %v2450, 0.6931472
      %v2452 = vlog2.pop %v2366
      %v2453 = vmul.f32 %v2452, 0.6931472
      %v2454 = vlog2.pop %v2369
      %v2455 = vmul.f32 %v2454, 0.6931472
      %v2456 = vlog2.pop %v2372
      %v2457 = vmul.f32 %v2456, 0.6931472
      %v2458 = vlog2.pop %v2375
      %v2459 = vmul.f32 %v2458, 0.6931472
      %v2460 = vlog2.pop %v2378
      %v2461 = vmul.f32 %v2460, 0.6931472
      %v2462 = vlog2.pop %v2381
      %v2463 = vmul.f32 %v2462, 0.6931472
      %v2464 = vlog2.pop %v2384
      %v2465 = vmul.f32 %v2464, 0.6931472
      %v2466 = vlog2.pop %v2387
      %v2467 = vmul.f32 %v2466, 0.6931472
      %v2468 = vlog2.pop %v2390
      %v2469 = vmul.f32 %v2468, 0.6931472
      %v2470 = vlog2.pop %v2393
      %v2471 = vmul.f32 %v2470, 0.6931472
      %v2472 = vlog2.pop %v2396
      %v2473 = vmul.f32 %v2472, 0.6931472
      %v2474 = vlog2.pop %v2399
      %v2475 = vmul.f32 %v2474, 0.6931472
      %v2476 = vlog2.pop %v2402
      %v2477 = vmul.f32 %v2476, 0.6931472
      %v2478 = vlog2.pop %v2405
      %v2479 = vmul.f32 %v2478, 0.6931472
      %v2480 = vlog2.pop %v2408
      %v2481 = vmul.f32 %v2480, 0.6931472
      %v2482 = vlog2.pop %v2411
      %v2483 = vmul.f32 %v2482, 0.6931472
      %v2484 = vlog2.pop %v2414
      %v2485 = vmul.f32 %v2484, 0.6931472
      %v2486 = vlog2.pop %v2417
      %v2487 = vmul.f32 %v2486, 0.6931472
      %v2488 = vlog2.pop %v2420
      %v2489 = vmul.f32 %v2488, 0.6931472
      %v2490 = vlog2.pop %v2423
      %v2491 = vmul.f32 %v2490, 0.6931472
      %v2492 = vlog2.pop %v2426
      %v2493 = vmul.f32 %v2492, 0.6931472
      %v2494 = vlog2.pop %v2429
      %v2495 = vmul.f32 %v2494, 0.6931472
      %v2496 = vlog2.pop %v2432
      %v2497 = vmul.f32 %v2496, 0.6931472
      %v2498 = vlog2.pop %v2435
      %v2499 = vmul.f32 %v2498, 0.6931472
      %vm2500 = vcmask 7168
      %2501 = vst.msk [vmem:[%s283] sm:$0xff] %vm2500, %v2437
      %2502 = vst.msk [vmem:[%s283 + $0x8] sm:$0xff] %vm2500, %v2439
      %2503 = vst.msk [vmem:[%s283 + $0x10] sm:$0xff] %vm2500, %v2441
      %2504 = vst.msk [vmem:[%s283 + $0x18] sm:$0xff] %vm2500, %v2443
      %2505 = vst.msk [vmem:[%s283 + $0x20] sm:$0xff] %vm2500, %v2445
      %2506 = vst.msk [vmem:[%s283 + $0x28] sm:$0xff] %vm2500, %v2447
      %2507 = vst.msk [vmem:[%s283 + $0x30] sm:$0xff] %vm2500, %v2449
      %2508 = vst.msk [vmem:[%s283 + $0x38] sm:$0xff] %vm2500, %v2451
      %2509 = vst.msk [vmem:[%s283 + $0x40] sm:$0xff] %vm2500, %v2453
      %2510 = vst.msk [vmem:[%s283 + $0x48] sm:$0xff] %vm2500, %v2455
      %2511 = vst.msk [vmem:[%s283 + $0x50] sm:$0xff] %vm2500, %v2457
      %2512 = vst.msk [vmem:[%s283 + $0x58] sm:$0xff] %vm2500, %v2459
      %2513 = vst.msk [vmem:[%s283 + $0x60] sm:$0xff] %vm2500, %v2461
      %2514 = vst.msk [vmem:[%s283 + $0x68] sm:$0xff] %vm2500, %v2463
      %2515 = vst.msk [vmem:[%s283 + $0x70] sm:$0xff] %vm2500, %v2465
      %2516 = vst.msk [vmem:[%s283 + $0x78] sm:$0xff] %vm2500, %v2467
      %2517 = vst.msk [vmem:[%s283 + $0x80] sm:$0xff] %vm2500, %v2469
      %2518 = vst.msk [vmem:[%s283 + $0x88] sm:$0xff] %vm2500, %v2471
      %2519 = vst.msk [vmem:[%s283 + $0x90] sm:$0xff] %vm2500, %v2473
      %2520 = vst.msk [vmem:[%s283 + $0x98] sm:$0xff] %vm2500, %v2475
      %2521 = vst.msk [vmem:[%s283 + $0xa0] sm:$0xff] %vm2500, %v2477
      %2522 = vst.msk [vmem:[%s283 + $0xa8] sm:$0xff] %vm2500, %v2479
      %2523 = vst.msk [vmem:[%s283 + $0xb0] sm:$0xff] %vm2500, %v2481
      %2524 = vst.msk [vmem:[%s283 + $0xb8] sm:$0xff] %vm2500, %v2483
      %2525 = vst.msk [vmem:[%s283 + $0xc0] sm:$0xff] %vm2500, %v2485
      %2526 = vst.msk [vmem:[%s283 + $0xc8] sm:$0xff] %vm2500, %v2487
      %2527 = vst.msk [vmem:[%s283 + $0xd0] sm:$0xff] %vm2500, %v2489
      %2528 = vst.msk [vmem:[%s283 + $0xd8] sm:$0xff] %vm2500, %v2491
      %2529 = vst.msk [vmem:[%s283 + $0xe0] sm:$0xff] %vm2500, %v2493
      %2530 = vst.msk [vmem:[%s283 + $0xe8] sm:$0xff] %vm2500, %v2495
      %2531 = vst.msk [vmem:[%s283 + $0xf0] sm:$0xff] %vm2500, %v2497
      %2532 = vst.msk [vmem:[%s283 + $0xf8] sm:$0xff] %vm2500, %v2499
      %s2533 = smul.u32 32, %s18
      %p2534 = scmp.lt.s32.totalorder %s2533, 127
      %s2535 = scalar_select %p2534, %s2533, 127
      %s2536 = smul.addr %s2535, 8
      %s2537 = scalar_lea.vmem %s7, %s2536
      // Predicated region
      $region49: #{tpu_custom_call.1} parent=47 // pred_check
        %p2538 = pneg %p188
      $region50: #{tpu_custom_call.1} parent=47 // pred_check_branch
        %2540 = sbr.rel (%p2538) target = $region52
      $region51: #{tpu_custom_call.1} parent=47 // pred_region
        %s2541 = smul.u32 32, %s18
      $region52: #{tpu_custom_call.1} parent=47 // pred_fallthru
        _
    $region48: #{tpu_custom_call.1} parent=5 // pred_fallthru
      _
    %p2542 = scmp.le.s32.totalorder 2, %s13
    // Predicated region
    $region53: #{tpu_custom_call.1} parent=5 // pred_check
      %p2543 = pneg %p2542
    $region54: #{tpu_custom_call.1} parent=5 // pred_check_branch
      %2545 = sbr.rel (%p2543) target = $region56
    $region55: #{tpu_custom_call.1} parent=5 // pred_region
      %s2546 = ssub.s32 %s13, 2
      // Predicated region
      $region57: #{tpu_custom_call.1} parent=55 // pred_check
        %p2547 = pneg %p194
      $region58: #{tpu_custom_call.1} parent=55 // pred_check_branch
        %2549 = sbr.rel (%p2547) target = $region60
      $region59: #{tpu_custom_call.1} parent=55 // pred_region
        %s2550 = smul.u32 32, %s19
        %p2551 = scmp.lt.s32.totalorder %s2550, 127
        %s2552 = scalar_select %p2551, %s2550, 127
        %s2553 = smul.addr %s2552, 8
        %s2554 = scalar_lea.vmem %s7, %s2553
      $region60: #{tpu_custom_call.1} parent=55 // pred_fallthru
        _
    $region56: #{tpu_custom_call.1} parent=5 // pred_fallthru
      _
  $region6: #{tpu_custom_call.1} parent=0 // loop_footer
    %s17 = sadd.s32 1, %s13
  $region7: #{tpu_custom_call.1} parent=0 // loop_footer_branch
    %12 = sbr.rel target = $region3
  $region8: #{tpu_custom_call.1} parent=0 // loop_exit
    _

</llo_original>
